<compile_context>
chip_gen: v6e
topology: v6e:2x2x1
jax: 0.10.0
libtpu: 0.0.40
codegen_flags: <defaults>
</compile_context>

<pallas_src>
import math
from functools import partial

import jax
import jax.numpy as jnp
from jax.experimental import pallas as pl
from jax.experimental.pallas import tpu as pltpu


# ----------------------------------------------------------------------------
# In-kernel helpers / Pallas kernels
# ----------------------------------------------------------------------------
def _mish(y):
    # mish(y) = y * tanh(softplus(y)) = y * (e^2 + 2e) / (e^2 + 2e + 2), e = exp(y)
    e = jnp.exp(jnp.minimum(y, 20.0))
    u = e * (e + 2.0)
    return y * u * pl.reciprocal(u + 2.0, approx=True)


def _mm_bias_mish_kernel(x_ref, w_ref, b_ref, o_ref):
    # y = mish(x @ w + b); activations cast to bf16 for the MXU, f32 accumulate.
    x = x_ref[...].astype(jnp.bfloat16)
    y = jnp.dot(x, w_ref[...], preferred_element_type=jnp.float32) + b_ref[...]
    o_ref[...] = _mish(y)


def _head_kernel(x_ref, w1_ref, b1_ref, w2_ref, b2_ref, o_ref, *, n_actions):
    # Fused dueling head, all VMEM-resident:
    #   h = mish(conv_out @ [a1|v1] + [a1_b|v1_b])            (M, 512)
    #   z = h @ blockdiag(a2.T, v2.T) + [a2_b|v2_b]           (M, A+1)
    #   q = val + (adv - mean(adv))                           (M, A)
    x = x_ref[...].astype(jnp.bfloat16)
    h = jnp.dot(x, w1_ref[...], preferred_element_type=jnp.float32) + b1_ref[...]
    h = _mish(h)
    z = jnp.dot(h.astype(jnp.bfloat16), w2_ref[...],
                preferred_element_type=jnp.float32) + b2_ref[...]
    adv = z[:, :n_actions]
    val = z[:, n_actions:n_actions + 1]
    o_ref[...] = val + (adv - jnp.mean(adv, axis=1, keepdims=True))


# ----------------------------------------------------------------------------
# pallas_call wrapper: M-tiled grid; weights/bias blocks stay resident
# ----------------------------------------------------------------------------
def _tiled_matmul_call(kernel_fn, x, consts, n_out, *, tile_m=512):
    """x: (M, K) f32; consts: list of 2-D arrays passed whole to every block."""
    M, K = x.shape
    tm = M if M <= tile_m else tile_m
    grid = (pl.cdiv(M, tm),)
    in_specs = [pl.BlockSpec((tm, K), lambda i: (i, 0))]
    for c in consts:
        in_specs.append(pl.BlockSpec(c.shape, lambda i: (0, 0)))
    return pl.pallas_call(
        kernel_fn,
        out_shape=jax.ShapeDtypeStruct((M, n_out), jnp.float32),
        grid=grid,
        in_specs=in_specs,
        out_specs=pl.BlockSpec((tm, n_out), lambda i: (i, 0)),
        compiler_params=pltpu.CompilerParams(dimension_semantics=("parallel",)),
    )(x, *consts)


# ----------------------------------------------------------------------------
# Glue: NHWC im2col (static strided slices) + fused conv kernel
# ----------------------------------------------------------------------------
def _im2col_nhwc(x, kh, kw, stride):
    """x: (B, H, W, C) -> patches (B*Ho*Wo, kh*kw*C) with K order (kh, kw, C)."""
    B, H, W, C = x.shape
    Ho = (H - kh) // stride + 1
    Wo = (W - kw) // stride + 1
    pieces = [x[:, i:i + stride * Ho:stride, j:j + stride * Wo:stride, :]
              for i in range(kh) for j in range(kw)]
    p = jnp.stack(pieces, axis=3)                     # (B, Ho, Wo, kh*kw, C)
    return p.reshape(B * Ho * Wo, kh * kw * C), Ho, Wo


def conv2d_mish_pallas(x_nhwc, w_mat, b_row, kh, kw, stride):
    """x_nhwc: (B,H,W,C); w_mat: (kh*kw*C, Cout) bf16; b_row: (1, Cout) f32."""
    B = x_nhwc.shape[0]
    patches, Ho, Wo = _im2col_nhwc(x_nhwc, kh, kw, stride)
    cout = w_mat.shape[1]
    y = _tiled_matmul_call(_mm_bias_mish_kernel, patches, [w_mat, b_row], cout)
    return y.reshape(B, Ho, Wo, cout)                 # stays NHWC


# ----------------------------------------------------------------------------
# Parameter initialization (deterministic, synthetic)
# ----------------------------------------------------------------------------
def init_params(key, in_ch, n_actions, conv_out_size):
    ks = jax.random.split(key, 20)

    def unif(k, shape, bound):
        return jax.random.uniform(k, shape, jnp.float32, -bound, bound)

    p = {}
    fan1 = in_ch * 8 * 8
    p["c1_w"] = unif(ks[0], (32, in_ch, 8, 8), 1.0 / math.sqrt(fan1))
    p["c1_b"] = unif(ks[1], (32,), 1.0 / math.sqrt(fan1))
    fan2 = 32 * 4 * 4
    p["c2_w"] = unif(ks[2], (64, 32, 4, 4), 1.0 / math.sqrt(fan2))
    p["c2_b"] = unif(ks[3], (64,), 1.0 / math.sqrt(fan2))
    fan3 = 64 * 3 * 3
    p["c3_w"] = unif(ks[4], (64, 64, 3, 3), 1.0 / math.sqrt(fan3))
    p["c3_b"] = unif(ks[5], (64,), 1.0 / math.sqrt(fan3))

    # fc_adv: NoisyLinear(conv_out, 256) -> Mish -> NoisyLinear(256, n_actions)
    sigma_init = 0.017
    std_a1 = math.sqrt(3.0 / conv_out_size)
    p["a1_w"] = unif(ks[6], (256, conv_out_size), std_a1)
    p["a1_b"] = unif(ks[7], (256,), std_a1)
    p["a1_sw"] = jnp.full((256, conv_out_size), sigma_init, jnp.float32)
    p["a1_sb"] = jnp.full((256,), sigma_init, jnp.float32)
    std_a2 = math.sqrt(3.0 / 256)
    p["a2_w"] = unif(ks[8], (n_actions, 256), std_a2)
    p["a2_b"] = unif(ks[9], (n_actions,), std_a2)
    p["a2_sw"] = jnp.full((n_actions, 256), sigma_init, jnp.float32)
    p["a2_sb"] = jnp.full((n_actions,), sigma_init, jnp.float32)

    # fc_val: Linear(conv_out, 256) -> Mish -> Linear(256, 1)
    p["v1_w"] = unif(ks[10], (256, conv_out_size), 1.0 / math.sqrt(conv_out_size))
    p["v1_b"] = unif(ks[11], (256,), 1.0 / math.sqrt(conv_out_size))
    p["v2_w"] = unif(ks[12], (1, 256), 1.0 / math.sqrt(256))
    p["v2_b"] = unif(ks[13], (1,), 1.0 / math.sqrt(256))
    return p


# ----------------------------------------------------------------------------
# Forward pass (RainbowDQN.forward)
# ----------------------------------------------------------------------------
def rainbow_forward(params, x, noise_key):
    B = x.shape[0]
    n_actions = params["a2_w"].shape[0]

    # NCHW uint8 -> NHWC f32 once; x / 256 as in the PyTorch reference.
    fx = x.astype(jnp.float32).transpose(0, 2, 3, 1) / 256.0

    # --- conv trunk: one fused matmul+bias+Mish Pallas kernel per layer ------
    def conv_mat(w):  # (Cout, Cin, kh, kw) -> (kh*kw*Cin, Cout) bf16
        co, ci, kh, kw = w.shape
        return w.transpose(2, 3, 1, 0).reshape(kh * kw * ci, co).astype(jnp.bfloat16)

    def bias_row(b):
        return b.reshape(1, -1).astype(jnp.float32)

    y = conv2d_mish_pallas(fx, conv_mat(params["c1_w"]), bias_row(params["c1_b"]), 8, 8, 4)
    y = conv2d_mish_pallas(y, conv_mat(params["c2_w"]), bias_row(params["c2_b"]), 4, 4, 2)
    y = conv2d_mish_pallas(y, conv_mat(params["c3_w"]), bias_row(params["c3_b"]), 3, 3, 1)
    _, H3, W3, C3 = y.shape
    conv_out = y.reshape(B, H3 * W3 * C3)        # NHWC flatten

    # --- NoisyLinear noise: fresh per forward (epsilon_*.normal_()) ----------
    nk = jax.random.split(noise_key, 4)
    a1_w = params["a1_w"] + params["a1_sw"] * jax.random.normal(nk[0], params["a1_w"].shape)
    a1_b = params["a1_b"] + params["a1_sb"] * jax.random.normal(nk[1], params["a1_b"].shape)
    a2_w = params["a2_w"] + params["a2_sw"] * jax.random.normal(nk[2], params["a2_w"].shape)
    a2_b = params["a2_b"] + params["a2_sb"] * jax.random.normal(nk[3], params["a2_b"].shape)

    # --- pack fused head weights (trace-time glue, no activation relayout) ---
    # PyTorch flattens conv_out in (C,H,W) order; the NHWC trunk flattens
    # (H,W,C) -- permute the FC weight rows once instead.
    def chw_rows_to_hwc(w_t):                    # (conv_out, N)
        K, N = w_t.shape
        return w_t.reshape(C3, H3, W3, N).transpose(1, 2, 0, 3).reshape(K, N)

    hid = params["v1_w"].shape[0]                # 256
    w1 = jnp.concatenate([chw_rows_to_hwc(a1_w.T),
                          chw_rows_to_hwc(params["v1_w"].T)], axis=1)   # (K, 512)
    b1 = jnp.concatenate([a1_b, params["v1_b"]]).reshape(1, -1)
    w2 = jnp.zeros((2 * hid, n_actions + 1), jnp.float32)
    w2 = w2.at[:hid, :n_actions].set(a2_w.T)
    w2 = w2.at[hid:, n_actions:].set(params["v2_w"].T)
    b2 = jnp.concatenate([a2_b, params["v2_b"]]).reshape(1, -1)

    # --- single fused head kernel (adv + val + dueling combine) --------------
    return _tiled_matmul_call(
        partial(_head_kernel, n_actions=n_actions),
        conv_out,
        [w1.astype(jnp.bfloat16), b1.astype(jnp.float32),
         w2.astype(jnp.bfloat16), b2.astype(jnp.float32)],
        n_actions)


if __name__ == "__main__":
    # Batch=2, channels=4, spatial 36x36 (smallest valid for the conv trunk:
    # 36 -> 8 -> 3 -> 1), n_actions=6, conv_out_size = 64*1*1.
    B, C, H, W = 2, 4, 36, 36
    n_actions = 6

    def _co(h, k, s):
        return (h - k) // s + 1

    h3 = _co(_co(_co(H, 8, 4), 4, 2), 3, 1)
    conv_out_size = 64 * h3 * h3

    root = jax.random.PRNGKey(0)
    k_param, k_input, k_noise = jax.random.split(root, 3)

    params = init_params(k_param, C, n_actions, conv_out_size)
    x = jax.random.randint(k_input, (B, C, H, W), 0, 256, dtype=jnp.int32).astype(jnp.uint8)

    fwd = jax.jit(rainbow_forward)
    q = jax.block_until_ready(fwd(params, x, k_noise))
    assert q.shape == (B, n_actions) and q.dtype == jnp.float32
    print("KERNEL_OK")
</pallas_src>

<mosaic_0001>
module attributes {stable_mosaic.version = 11 : i64} {
  func.func @_mm_bias_mish_kernel(%arg0: i32, %arg1: memref<128x256xf32, #tpu.memory_space<vmem>>, %arg2: memref<256x32xbf16, #tpu.memory_space<vmem>>, %arg3: memref<1x32xf32, #tpu.memory_space<vmem>>, %arg4: memref<128x32xf32, #tpu.memory_space<vmem>>) attributes {dimension_semantics = [#tpu.dimension_semantics<parallel>], iteration_bounds = array<i64: 1>, scalar_prefetch = 0 : i64, scratch_operands = 0 : i64, tpu.core_type = #tpu.core_type<tc>, window_params = [{transform_indices = @transform_0, window_bounds = array<i64: 128, 256>}, {pipeline_mode = #tpu.pipeline_mode<synchronous>, transform_indices = @transform_1, window_bounds = array<i64: 256, 32>}, {pipeline_mode = #tpu.pipeline_mode<synchronous>, transform_indices = @transform_2, window_bounds = array<i64: 1, 32>}, {transform_indices = @transform_3, window_bounds = array<i64: 128, 32>}]} {
    %c0 = arith.constant 0 : index
    %c0_0 = arith.constant 0 : index
    %0 = vector.load %arg1[%c0, %c0_0] : memref<128x256xf32, #tpu.memory_space<vmem>>, vector<128x256xf32>
    %1 = arith.truncf %0 : vector<128x256xf32> to vector<128x256xbf16>
    %c0_1 = arith.constant 0 : index
    %c0_2 = arith.constant 0 : index
    %2 = vector.load %arg2[%c0_1, %c0_2] : memref<256x32xbf16, #tpu.memory_space<vmem>>, vector<256x32xbf16>
    %cst = arith.constant dense<0.000000e+00> : vector<128x32xf32>
    %3 = tpu.matmul %1, %2, %cst {dimension_numbers = #tpu.dot_dimension_numbers<[1], [0], [0], [1], [0, 0, 1, 1], [], []>} : vector<128x256xbf16>, vector<256x32xbf16>, vector<128x32xf32> -> vector<128x32xf32>
    %c0_3 = arith.constant 0 : index
    %c0_4 = arith.constant 0 : index
    %4 = vector.load %arg3[%c0_3, %c0_4] : memref<1x32xf32, #tpu.memory_space<vmem>>, vector<1x32xf32>
    %5 = vector.broadcast %4 : vector<1x32xf32> to vector<128x32xf32>
    %6 = arith.addf %3, %5 : vector<128x32xf32>
    %cst_5 = arith.constant 2.000000e+01 : f32
    %7 = vector.broadcast %cst_5 : f32 to vector<128x32xf32>
    %8 = arith.minimumf %6, %7 : vector<128x32xf32>
    %9 = math.exp %8 : vector<128x32xf32>
    %cst_6 = arith.constant 2.000000e+00 : f32
    %10 = vector.broadcast %cst_6 : f32 to vector<128x32xf32>
    %11 = arith.addf %9, %10 : vector<128x32xf32>
    %12 = arith.mulf %9, %11 : vector<128x32xf32>
    %13 = arith.mulf %6, %12 : vector<128x32xf32>
    %cst_7 = arith.constant 2.000000e+00 : f32
    %14 = vector.broadcast %cst_7 : f32 to vector<128x32xf32>
    %15 = arith.addf %12, %14 : vector<128x32xf32>
    %16 = tpu.reciprocal %15 {approx = true} : vector<128x32xf32> -> vector<128x32xf32>
    %17 = arith.mulf %13, %16 : vector<128x32xf32>
    %c0_8 = arith.constant 0 : index
    %c0_9 = arith.constant 0 : index
    %18 = vector.load %arg4[%c0_8, %c0_9] : memref<128x32xf32, #tpu.memory_space<vmem>>, vector<128x32xf32>
    tpu.vector_store %arg4[%c0_8, %c0_9], %17 {strides = array<i32>} : memref<128x32xf32, #tpu.memory_space<vmem>>, vector<128x32xf32>,
    return
  }
  func.func @transform_0(%arg0: i32) -> (i32, i32) {
    %c0_i32 = arith.constant 0 : i32
    %c0_i32_0 = arith.constant 0 : i32
    return %arg0, %c0_i32 : i32, i32
  }
  func.func @transform_1(%arg0: i32) -> (i32, i32) {
    %c0_i32 = arith.constant 0 : i32
    %c0_i32_0 = arith.constant 0 : i32
    %c0_i32_1 = arith.constant 0 : i32
    return %c0_i32, %c0_i32_0 : i32, i32
  }
  func.func @transform_2(%arg0: i32) -> (i32, i32) {
    %c0_i32 = arith.constant 0 : i32
    %c0_i32_0 = arith.constant 0 : i32
    %c0_i32_1 = arith.constant 0 : i32
    return %c0_i32, %c0_i32_0 : i32, i32
  }
  func.func @transform_3(%arg0: i32) -> (i32, i32) {
    %c0_i32 = arith.constant 0 : i32
    %c0_i32_0 = arith.constant 0 : i32
    return %arg0, %c0_i32 : i32, i32
  }
}

module attributes {stable_mosaic.version = 11 : i64} {
  func.func @_mm_bias_mish_kernel(%arg0: i32, %arg1: memref<18x512xf32, #tpu.memory_space<vmem>>, %arg2: memref<512x64xbf16, #tpu.memory_space<vmem>>, %arg3: memref<1x64xf32, #tpu.memory_space<vmem>>, %arg4: memref<18x64xf32, #tpu.memory_space<vmem>>) attributes {dimension_semantics = [#tpu.dimension_semantics<parallel>], iteration_bounds = array<i64: 1>, scalar_prefetch = 0 : i64, scratch_operands = 0 : i64, tpu.core_type = #tpu.core_type<tc>, window_params = [{transform_indices = @transform_0, window_bounds = array<i64: 18, 512>}, {pipeline_mode = #tpu.pipeline_mode<synchronous>, transform_indices = @transform_1, window_bounds = array<i64: 512, 64>}, {pipeline_mode = #tpu.pipeline_mode<synchronous>, transform_indices = @transform_2, window_bounds = array<i64: 1, 64>}, {transform_indices = @transform_3, window_bounds = array<i64: 18, 64>}]} {
    %c0 = arith.constant 0 : index
    %c0_0 = arith.constant 0 : index
    %0 = vector.load %arg1[%c0, %c0_0] : memref<18x512xf32, #tpu.memory_space<vmem>>, vector<18x512xf32>
    %1 = arith.truncf %0 : vector<18x512xf32> to vector<18x512xbf16>
    %c0_1 = arith.constant 0 : index
    %c0_2 = arith.constant 0 : index
    %2 = vector.load %arg2[%c0_1, %c0_2] : memref<512x64xbf16, #tpu.memory_space<vmem>>, vector<512x64xbf16>
    %cst = arith.constant dense<0.000000e+00> : vector<18x64xf32>
    %3 = tpu.matmul %1, %2, %cst {dimension_numbers = #tpu.dot_dimension_numbers<[1], [0], [0], [1], [0, 0, 1, 1], [], []>} : vector<18x512xbf16>, vector<512x64xbf16>, vector<18x64xf32> -> vector<18x64xf32>
    %c0_3 = arith.constant 0 : index
    %c0_4 = arith.constant 0 : index
    %4 = vector.load %arg3[%c0_3, %c0_4] : memref<1x64xf32, #tpu.memory_space<vmem>>, vector<1x64xf32>
    %5 = vector.broadcast %4 : vector<1x64xf32> to vector<18x64xf32>
    %6 = arith.addf %3, %5 : vector<18x64xf32>
    %cst_5 = arith.constant 2.000000e+01 : f32
    %7 = vector.broadcast %cst_5 : f32 to vector<18x64xf32>
    %8 = arith.minimumf %6, %7 : vector<18x64xf32>
    %9 = math.exp %8 : vector<18x64xf32>
    %cst_6 = arith.constant 2.000000e+00 : f32
    %10 = vector.broadcast %cst_6 : f32 to vector<18x64xf32>
    %11 = arith.addf %9, %10 : vector<18x64xf32>
    %12 = arith.mulf %9, %11 : vector<18x64xf32>
    %13 = arith.mulf %6, %12 : vector<18x64xf32>
    %cst_7 = arith.constant 2.000000e+00 : f32
    %14 = vector.broadcast %cst_7 : f32 to vector<18x64xf32>
    %15 = arith.addf %12, %14 : vector<18x64xf32>
    %16 = tpu.reciprocal %15 {approx = true} : vector<18x64xf32> -> vector<18x64xf32>
    %17 = arith.mulf %13, %16 : vector<18x64xf32>
    %c0_8 = arith.constant 0 : index
    %c0_9 = arith.constant 0 : index
    %18 = vector.load %arg4[%c0_8, %c0_9] : memref<18x64xf32, #tpu.memory_space<vmem>>, vector<18x64xf32>
    tpu.vector_store %arg4[%c0_8, %c0_9], %17 {strides = array<i32>} : memref<18x64xf32, #tpu.memory_space<vmem>>, vector<18x64xf32>,
    return
  }
  func.func @transform_0(%arg0: i32) -> (i32, i32) {
    %c0_i32 = arith.constant 0 : i32
    %c0_i32_0 = arith.constant 0 : i32
    return %arg0, %c0_i32 : i32, i32
  }
  func.func @transform_1(%arg0: i32) -> (i32, i32) {
    %c0_i32 = arith.constant 0 : i32
    %c0_i32_0 = arith.constant 0 : i32
    %c0_i32_1 = arith.constant 0 : i32
    return %c0_i32, %c0_i32_0 : i32, i32
  }
  func.func @transform_2(%arg0: i32) -> (i32, i32) {
    %c0_i32 = arith.constant 0 : i32
    %c0_i32_0 = arith.constant 0 : i32
    %c0_i32_1 = arith.constant 0 : i32
    return %c0_i32, %c0_i32_0 : i32, i32
  }
  func.func @transform_3(%arg0: i32) -> (i32, i32) {
    %c0_i32 = arith.constant 0 : i32
    %c0_i32_0 = arith.constant 0 : i32
    return %arg0, %c0_i32 : i32, i32
  }
}

module attributes {stable_mosaic.version = 11 : i64} {
  func.func @_mm_bias_mish_kernel(%arg0: i32, %arg1: memref<2x576xf32, #tpu.memory_space<vmem>>, %arg2: memref<576x64xbf16, #tpu.memory_space<vmem>>, %arg3: memref<1x64xf32, #tpu.memory_space<vmem>>, %arg4: memref<2x64xf32, #tpu.memory_space<vmem>>) attributes {dimension_semantics = [#tpu.dimension_semantics<parallel>], iteration_bounds = array<i64: 1>, scalar_prefetch = 0 : i64, scratch_operands = 0 : i64, tpu.core_type = #tpu.core_type<tc>, window_params = [{transform_indices = @transform_0, window_bounds = array<i64: 2, 576>}, {pipeline_mode = #tpu.pipeline_mode<synchronous>, transform_indices = @transform_1, window_bounds = array<i64: 576, 64>}, {pipeline_mode = #tpu.pipeline_mode<synchronous>, transform_indices = @transform_2, window_bounds = array<i64: 1, 64>}, {transform_indices = @transform_3, window_bounds = array<i64: 2, 64>}]} {
    %c0 = arith.constant 0 : index
    %c0_0 = arith.constant 0 : index
    %0 = vector.load %arg1[%c0, %c0_0] : memref<2x576xf32, #tpu.memory_space<vmem>>, vector<2x576xf32>
    %1 = arith.truncf %0 : vector<2x576xf32> to vector<2x576xbf16>
    %c0_1 = arith.constant 0 : index
    %c0_2 = arith.constant 0 : index
    %2 = vector.load %arg2[%c0_1, %c0_2] : memref<576x64xbf16, #tpu.memory_space<vmem>>, vector<576x64xbf16>
    %cst = arith.constant dense<0.000000e+00> : vector<2x64xf32>
    %3 = tpu.matmul %1, %2, %cst {dimension_numbers = #tpu.dot_dimension_numbers<[1], [0], [0], [1], [0, 0, 1, 1], [], []>} : vector<2x576xbf16>, vector<576x64xbf16>, vector<2x64xf32> -> vector<2x64xf32>
    %c0_3 = arith.constant 0 : index
    %c0_4 = arith.constant 0 : index
    %4 = vector.load %arg3[%c0_3, %c0_4] : memref<1x64xf32, #tpu.memory_space<vmem>>, vector<1x64xf32>
    %5 = vector.broadcast %4 : vector<1x64xf32> to vector<2x64xf32>
    %6 = arith.addf %3, %5 : vector<2x64xf32>
    %cst_5 = arith.constant 2.000000e+01 : f32
    %7 = vector.broadcast %cst_5 : f32 to vector<2x64xf32>
    %8 = arith.minimumf %6, %7 : vector<2x64xf32>
    %9 = math.exp %8 : vector<2x64xf32>
    %cst_6 = arith.constant 2.000000e+00 : f32
    %10 = vector.broadcast %cst_6 : f32 to vector<2x64xf32>
    %11 = arith.addf %9, %10 : vector<2x64xf32>
    %12 = arith.mulf %9, %11 : vector<2x64xf32>
    %13 = arith.mulf %6, %12 : vector<2x64xf32>
    %cst_7 = arith.constant 2.000000e+00 : f32
    %14 = vector.broadcast %cst_7 : f32 to vector<2x64xf32>
    %15 = arith.addf %12, %14 : vector<2x64xf32>
    %16 = tpu.reciprocal %15 {approx = true} : vector<2x64xf32> -> vector<2x64xf32>
    %17 = arith.mulf %13, %16 : vector<2x64xf32>
    %c0_8 = arith.constant 0 : index
    %c0_9 = arith.constant 0 : index
    %18 = vector.load %arg4[%c0_8, %c0_9] : memref<2x64xf32, #tpu.memory_space<vmem>>, vector<2x64xf32>
    tpu.vector_store %arg4[%c0_8, %c0_9], %17 {strides = array<i32>} : memref<2x64xf32, #tpu.memory_space<vmem>>, vector<2x64xf32>,
    return
  }
  func.func @transform_0(%arg0: i32) -> (i32, i32) {
    %c0_i32 = arith.constant 0 : i32
    %c0_i32_0 = arith.constant 0 : i32
    return %arg0, %c0_i32 : i32, i32
  }
  func.func @transform_1(%arg0: i32) -> (i32, i32) {
    %c0_i32 = arith.constant 0 : i32
    %c0_i32_0 = arith.constant 0 : i32
    %c0_i32_1 = arith.constant 0 : i32
    return %c0_i32, %c0_i32_0 : i32, i32
  }
  func.func @transform_2(%arg0: i32) -> (i32, i32) {
    %c0_i32 = arith.constant 0 : i32
    %c0_i32_0 = arith.constant 0 : i32
    %c0_i32_1 = arith.constant 0 : i32
    return %c0_i32, %c0_i32_0 : i32, i32
  }
  func.func @transform_3(%arg0: i32) -> (i32, i32) {
    %c0_i32 = arith.constant 0 : i32
    %c0_i32_0 = arith.constant 0 : i32
    return %arg0, %c0_i32 : i32, i32
  }
}

module attributes {stable_mosaic.version = 11 : i64} {
  func.func @_head_kernel(%arg0: i32, %arg1: memref<2x64xf32, #tpu.memory_space<vmem>>, %arg2: memref<64x512xbf16, #tpu.memory_space<vmem>>, %arg3: memref<1x512xf32, #tpu.memory_space<vmem>>, %arg4: memref<512x7xbf16, #tpu.memory_space<vmem>>, %arg5: memref<1x7xf32, #tpu.memory_space<vmem>>, %arg6: memref<2x6xf32, #tpu.memory_space<vmem>>) attributes {dimension_semantics = [#tpu.dimension_semantics<parallel>], iteration_bounds = array<i64: 1>, scalar_prefetch = 0 : i64, scratch_operands = 0 : i64, tpu.core_type = #tpu.core_type<tc>, window_params = [{transform_indices = @transform_0, window_bounds = array<i64: 2, 64>}, {pipeline_mode = #tpu.pipeline_mode<synchronous>, transform_indices = @transform_1, window_bounds = array<i64: 64, 512>}, {pipeline_mode = #tpu.pipeline_mode<synchronous>, transform_indices = @transform_2, window_bounds = array<i64: 1, 512>}, {pipeline_mode = #tpu.pipeline_mode<synchronous>, transform_indices = @transform_3, window_bounds = array<i64: 512, 7>}, {pipeline_mode = #tpu.pipeline_mode<synchronous>, transform_indices = @transform_4, window_bounds = array<i64: 1, 7>}, {transform_indices = @transform_5, window_bounds = array<i64: 2, 6>}]} {
    %c0 = arith.constant 0 : index
    %c0_0 = arith.constant 0 : index
    %0 = vector.load %arg1[%c0, %c0_0] : memref<2x64xf32, #tpu.memory_space<vmem>>, vector<2x64xf32>
    %1 = arith.truncf %0 : vector<2x64xf32> to vector<2x64xbf16>
    %c0_1 = arith.constant 0 : index
    %c0_2 = arith.constant 0 : index
    %2 = vector.load %arg2[%c0_1, %c0_2] : memref<64x512xbf16, #tpu.memory_space<vmem>>, vector<64x512xbf16>
    %cst = arith.constant dense<0.000000e+00> : vector<2x512xf32>
    %3 = tpu.matmul %1, %2, %cst {dimension_numbers = #tpu.dot_dimension_numbers<[1], [0], [0], [1], [0, 0, 1, 1], [], []>} : vector<2x64xbf16>, vector<64x512xbf16>, vector<2x512xf32> -> vector<2x512xf32>
    %c0_3 = arith.constant 0 : index
    %c0_4 = arith.constant 0 : index
    %4 = vector.load %arg3[%c0_3, %c0_4] : memref<1x512xf32, #tpu.memory_space<vmem>>, vector<1x512xf32>
    %5 = vector.broadcast %4 : vector<1x512xf32> to vector<2x512xf32>
    %6 = arith.addf %3, %5 : vector<2x512xf32>
    %cst_5 = arith.constant 2.000000e+01 : f32
    %7 = vector.broadcast %cst_5 : f32 to vector<2x512xf32>
    %8 = arith.minimumf %6, %7 : vector<2x512xf32>
    %9 = math.exp %8 : vector<2x512xf32>
    %cst_6 = arith.constant 2.000000e+00 : f32
    %10 = vector.broadcast %cst_6 : f32 to vector<2x512xf32>
    %11 = arith.addf %9, %10 : vector<2x512xf32>
    %12 = arith.mulf %9, %11 : vector<2x512xf32>
    %13 = arith.mulf %6, %12 : vector<2x512xf32>
    %cst_7 = arith.constant 2.000000e+00 : f32
    %14 = vector.broadcast %cst_7 : f32 to vector<2x512xf32>
    %15 = arith.addf %12, %14 : vector<2x512xf32>
    %16 = tpu.reciprocal %15 {approx = true} : vector<2x512xf32> -> vector<2x512xf32>
    %17 = arith.mulf %13, %16 : vector<2x512xf32>
    %18 = arith.truncf %17 : vector<2x512xf32> to vector<2x512xbf16>
    %c0_8 = arith.constant 0 : index
    %c0_9 = arith.constant 0 : index
    %19 = vector.load %arg4[%c0_8, %c0_9] : memref<512x7xbf16, #tpu.memory_space<vmem>>, vector<512x7xbf16>
    %cst_10 = arith.constant dense<0.000000e+00> : vector<2x7xf32>
    %20 = tpu.matmul %18, %19, %cst_10 {dimension_numbers = #tpu.dot_dimension_numbers<[1], [0], [0], [1], [0, 0, 1, 1], [], []>} : vector<2x512xbf16>, vector<512x7xbf16>, vector<2x7xf32> -> vector<2x7xf32>
    %c0_11 = arith.constant 0 : index
    %c0_12 = arith.constant 0 : index
    %21 = vector.load %arg5[%c0_11, %c0_12] : memref<1x7xf32, #tpu.memory_space<vmem>>, vector<1x7xf32>
    %22 = vector.broadcast %21 : vector<1x7xf32> to vector<2x7xf32>
    %23 = arith.addf %20, %22 : vector<2x7xf32>
    %24 = vector.extract_strided_slice %23 {offsets = [0, 0], sizes = [2, 6], strides = [1, 1]} : vector<2x7xf32> to vector<2x6xf32>
    %25 = vector.extract_strided_slice %23 {offsets = [0, 6], sizes = [2, 1], strides = [1, 1]} : vector<2x7xf32> to vector<2x1xf32>
    %cst_13 = arith.constant dense<0.000000e+00> : vector<2xf32>
    %26 = vector.multi_reduction <add>, %24, %cst_13 [1] : vector<2x6xf32> to vector<2xf32>
    %27 = vector.shape_cast %26 : vector<2xf32> to vector<2x1xf32>
    %cst_14 = arith.constant 6.000000e+00 : f32
    %28 = vector.broadcast %cst_14 : f32 to vector<2x1xf32>
    %29 = arith.divf %27, %28 : vector<2x1xf32>
    %30 = vector.broadcast %29 : vector<2x1xf32> to vector<2x6xf32>
    %31 = arith.subf %24, %30 : vector<2x6xf32>
    %32 = vector.broadcast %25 : vector<2x1xf32> to vector<2x6xf32>
    %33 = arith.addf %32, %31 : vector<2x6xf32>
    %c0_15 = arith.constant 0 : index
    %c0_16 = arith.constant 0 : index
    %34 = vector.load %arg6[%c0_15, %c0_16] : memref<2x6xf32, #tpu.memory_space<vmem>>, vector<2x6xf32>
    tpu.vector_store %arg6[%c0_15, %c0_16], %33 {strides = array<i32>} : memref<2x6xf32, #tpu.memory_space<vmem>>, vector<2x6xf32>,
    return
  }
  func.func @transform_0(%arg0: i32) -> (i32, i32) {
    %c0_i32 = arith.constant 0 : i32
    %c0_i32_0 = arith.constant 0 : i32
    return %arg0, %c0_i32 : i32, i32
  }
  func.func @transform_1(%arg0: i32) -> (i32, i32) {
    %c0_i32 = arith.constant 0 : i32
    %c0_i32_0 = arith.constant 0 : i32
    %c0_i32_1 = arith.constant 0 : i32
    return %c0_i32, %c0_i32_0 : i32, i32
  }
  func.func @transform_2(%arg0: i32) -> (i32, i32) {
    %c0_i32 = arith.constant 0 : i32
    %c0_i32_0 = arith.constant 0 : i32
    %c0_i32_1 = arith.constant 0 : i32
    return %c0_i32, %c0_i32_0 : i32, i32
  }
  func.func @transform_3(%arg0: i32) -> (i32, i32) {
    %c0_i32 = arith.constant 0 : i32
    %c0_i32_0 = arith.constant 0 : i32
    %c0_i32_1 = arith.constant 0 : i32
    return %c0_i32, %c0_i32_0 : i32, i32
  }
  func.func @transform_4(%arg0: i32) -> (i32, i32) {
    %c0_i32 = arith.constant 0 : i32
    %c0_i32_0 = arith.constant 0 : i32
    %c0_i32_1 = arith.constant 0 : i32
    return %c0_i32, %c0_i32_0 : i32, i32
  }
  func.func @transform_5(%arg0: i32) -> (i32, i32) {
    %c0_i32 = arith.constant 0 : i32
    %c0_i32_0 = arith.constant 0 : i32
    return %arg0, %c0_i32 : i32, i32
  }
}

</mosaic_0001>

<llo_original>
// kernel: rainbow_forward.6
$region0: #{rainbow_forward.6}
  #allocation0 [shape = 'u32[]', space=smem, size = 0x4, offset = 0x4, fixed_abs, tag = 'smem constant byte address 0x4 - core index']
  #allocation1 [shape = 'u32[144,128]{1,0:T(1,128)}', space=vmem, size = 0x12000, scoped, tag = 'internal scratch']
  %s0 = inlined_call_operand.vmem [shape: f32[128,256], index: 0, kind: input, shape index: {}]
  %s1 = inlined_call_operand.vmem [shape: bf16[256,32], index: 1, kind: input, shape index: {}]
  %s2 = inlined_call_operand.vmem [shape: f32[1,32], index: 2, kind: input, shape index: {}]
  %s3 = inlined_call_operand.vmem [shape: f32[128,32], index: 3, kind: output, shape index: {}]
  %s4 = sld [smem:[#allocation0]]
  $region22: #{rainbow_forward.6} parent=0
    _
  %s6 = ssub.s32 1, %s4
  %s7 = scalar_select 0, %s6, %s4
  // Predicated region
  $region2: #{rainbow_forward.6} parent=0 // pred_check
    _
  $region3: #{rainbow_forward.6} parent=0 // pred_check_branch
    %9 = sbr.rel (0) target = $region5
  $region4: #{rainbow_forward.6} parent=0 // pred_region
    _
  $region5: #{rainbow_forward.6} parent=0 // pred_fallthru
    _
  // Predicated region
  $region6: #{rainbow_forward.6} parent=0 // pred_check
    _
  $region7: #{rainbow_forward.6} parent=0 // pred_check_branch
    %11 = sbr.rel (0) target = $region9
  $region8: #{rainbow_forward.6} parent=0 // pred_region
    _
  $region9: #{rainbow_forward.6} parent=0 // pred_fallthru
    _
  // Predicated region
  $region10: #{rainbow_forward.6} parent=0 // pred_check
    _
  $region11: #{rainbow_forward.6} parent=0 // pred_check_branch
    %13 = sbr.rel (0) target = $region13
  $region12: #{rainbow_forward.6} parent=0 // pred_region
    _
  $region13: #{rainbow_forward.6} parent=0 // pred_fallthru
    _
  %v15 = vld [vmem:[%s0] sm:$0xff]
  %v16 = vld [vmem:[%s0 + $0x8] sm:$0xff]
  %v17 = vld [vmem:[%s0 + $0x10] sm:$0xff]
  %v18 = vld [vmem:[%s0 + $0x18] sm:$0xff]
  %v19 = vld [vmem:[%s0 + $0x20] sm:$0xff]
  %v20 = vld [vmem:[%s0 + $0x28] sm:$0xff]
  %v21 = vld [vmem:[%s0 + $0x30] sm:$0xff]
  %v22 = vld [vmem:[%s0 + $0x38] sm:$0xff]
  %v23 = vld [vmem:[%s0 + $0x40] sm:$0xff]
  %v24 = vld [vmem:[%s0 + $0x48] sm:$0xff]
  %v25 = vld [vmem:[%s0 + $0x50] sm:$0xff]
  %v26 = vld [vmem:[%s0 + $0x58] sm:$0xff]
  %v27 = vld [vmem:[%s0 + $0x60] sm:$0xff]
  %v28 = vld [vmem:[%s0 + $0x68] sm:$0xff]
  %v29 = vld [vmem:[%s0 + $0x70] sm:$0xff]
  %v30 = vld [vmem:[%s0 + $0x78] sm:$0xff]
  %v31 = vld [vmem:[%s0 + $0x80] sm:$0xff]
  %v32 = vld [vmem:[%s0 + $0x88] sm:$0xff]
  %v33 = vld [vmem:[%s0 + $0x90] sm:$0xff]
  %v34 = vld [vmem:[%s0 + $0x98] sm:$0xff]
  %v35 = vld [vmem:[%s0 + $0xa0] sm:$0xff]
  %v36 = vld [vmem:[%s0 + $0xa8] sm:$0xff]
  %v37 = vld [vmem:[%s0 + $0xb0] sm:$0xff]
  %v38 = vld [vmem:[%s0 + $0xb8] sm:$0xff]
  %v39 = vld [vmem:[%s0 + $0xc0] sm:$0xff]
  %v40 = vld [vmem:[%s0 + $0xc8] sm:$0xff]
  %v41 = vld [vmem:[%s0 + $0xd0] sm:$0xff]
  %v42 = vld [vmem:[%s0 + $0xd8] sm:$0xff]
  %v43 = vld [vmem:[%s0 + $0xe0] sm:$0xff]
  %v44 = vld [vmem:[%s0 + $0xe8] sm:$0xff]
  %v45 = vld [vmem:[%s0 + $0xf0] sm:$0xff]
  %v46 = vld [vmem:[%s0 + $0xf8] sm:$0xff]
  %v47 = vpack.c.bf16 %v17, %v15
  %v48 = vpack.c.bf16 %v18, %v16
  %v49 = vpack.c.bf16 %v21, %v19
  %v50 = vpack.c.bf16 %v22, %v20
  %v51 = vpack.c.bf16 %v25, %v23
  %v52 = vpack.c.bf16 %v26, %v24
  %v53 = vpack.c.bf16 %v29, %v27
  %v54 = vpack.c.bf16 %v30, %v28
  %v55 = vpack.c.bf16 %v33, %v31
  %v56 = vpack.c.bf16 %v34, %v32
  %v57 = vpack.c.bf16 %v37, %v35
  %v58 = vpack.c.bf16 %v38, %v36
  %v59 = vpack.c.bf16 %v41, %v39
  %v60 = vpack.c.bf16 %v42, %v40
  %v61 = vpack.c.bf16 %v45, %v43
  %v62 = vpack.c.bf16 %v46, %v44
  %v63 = vld [vmem:[%s1] sm:$0xf]
  %v64 = vld [vmem:[%s1 + $0x4] sm:$0xf]
  %v65 = vld [vmem:[%s1 + $0x8] sm:$0xf]
  %v66 = vld [vmem:[%s1 + $0xc] sm:$0xf]
  %v67 = vld [vmem:[%s1 + $0x10] sm:$0xf]
  %v68 = vld [vmem:[%s1 + $0x14] sm:$0xf]
  %v69 = vld [vmem:[%s1 + $0x18] sm:$0xf]
  %v70 = vld [vmem:[%s1 + $0x1c] sm:$0xf]
  %v71 = vld [vmem:[%s1 + $0x20] sm:$0xf]
  %v72 = vld [vmem:[%s1 + $0x24] sm:$0xf]
  %v73 = vld [vmem:[%s1 + $0x28] sm:$0xf]
  %v74 = vld [vmem:[%s1 + $0x2c] sm:$0xf]
  %v75 = vld [vmem:[%s1 + $0x30] sm:$0xf]
  %v76 = vld [vmem:[%s1 + $0x34] sm:$0xf]
  %v77 = vld [vmem:[%s1 + $0x38] sm:$0xf]
  %v78 = vld [vmem:[%s1 + $0x3c] sm:$0xf]
  %v79 = vld [vmem:[%s1 + $0x40] sm:$0xf]
  %v80 = vld [vmem:[%s1 + $0x44] sm:$0xf]
  %v81 = vld [vmem:[%s1 + $0x48] sm:$0xf]
  %v82 = vld [vmem:[%s1 + $0x4c] sm:$0xf]
  %v83 = vld [vmem:[%s1 + $0x50] sm:$0xf]
  %v84 = vld [vmem:[%s1 + $0x54] sm:$0xf]
  %v85 = vld [vmem:[%s1 + $0x58] sm:$0xf]
  %v86 = vld [vmem:[%s1 + $0x5c] sm:$0xf]
  %v87 = vld [vmem:[%s1 + $0x60] sm:$0xf]
  %v88 = vld [vmem:[%s1 + $0x64] sm:$0xf]
  %v89 = vld [vmem:[%s1 + $0x68] sm:$0xf]
  %v90 = vld [vmem:[%s1 + $0x6c] sm:$0xf]
  %v91 = vld [vmem:[%s1 + $0x70] sm:$0xf]
  %v92 = vld [vmem:[%s1 + $0x74] sm:$0xf]
  %v93 = vld [vmem:[%s1 + $0x78] sm:$0xf]
  %v94 = vld [vmem:[%s1 + $0x7c] sm:$0xf]
  %v95 = vld [vmem:[%s2] sm:$0x1]
  %v97 = vlaneseq
  %v98 = vshrl.u32 %v97, 7
  %v99 = vsub.s32 0, %v98
  %v100 = vrot.slane %v95, %v99
  %v134 = vunpack.c.l.b16 %v63
  %v135 = vunpack.c.l.b16 %v64
  %v136 = vunpack.c.l.b16 %v65
  %v137 = vunpack.c.l.b16 %v66
  %v138 = vunpack.c.l.b16 %v67
  %v139 = vunpack.c.l.b16 %v68
  %v140 = vunpack.c.l.b16 %v69
  %v141 = vunpack.c.l.b16 %v70
  %v142 = vunpack.c.l.b16 %v71
  %v143 = vunpack.c.l.b16 %v72
  %v144 = vunpack.c.l.b16 %v73
  %v145 = vunpack.c.l.b16 %v74
  %v146 = vunpack.c.l.b16 %v75
  %v147 = vunpack.c.l.b16 %v76
  %v148 = vunpack.c.l.b16 %v77
  %v149 = vunpack.c.l.b16 %v78
  %v150 = vunpack.c.l.b16 %v79
  %v151 = vunpack.c.l.b16 %v80
  %v152 = vunpack.c.l.b16 %v81
  %v153 = vunpack.c.l.b16 %v82
  %v154 = vunpack.c.l.b16 %v83
  %v155 = vunpack.c.l.b16 %v84
  %v156 = vunpack.c.l.b16 %v85
  %v157 = vunpack.c.l.b16 %v86
  %v158 = vunpack.c.l.b16 %v87
  %v159 = vunpack.c.l.b16 %v88
  %v160 = vunpack.c.l.b16 %v89
  %v161 = vunpack.c.l.b16 %v90
  %v162 = vunpack.c.l.b16 %v91
  %v163 = vunpack.c.l.b16 %v92
  %v164 = vunpack.c.l.b16 %v93
  %v165 = vunpack.c.l.b16 %v94
  %v166 = vpack.c.b16 %v135, %v134
  %v167 = vpack.c.b16 %v137, %v136
  %v168 = vpack.c.b16 %v139, %v138
  %v169 = vpack.c.b16 %v141, %v140
  %v170 = vpack.c.b16 %v143, %v142
  %v171 = vpack.c.b16 %v145, %v144
  %v172 = vpack.c.b16 %v147, %v146
  %v173 = vpack.c.b16 %v149, %v148
  %v174 = vpack.c.b16 %v151, %v150
  %v175 = vpack.c.b16 %v153, %v152
  %v176 = vpack.c.b16 %v155, %v154
  %v177 = vpack.c.b16 %v157, %v156
  %v178 = vpack.c.b16 %v159, %v158
  %v179 = vpack.c.b16 %v161, %v160
  %v180 = vpack.c.b16 %v163, %v162
  %v181 = vpack.c.b16 %v165, %v164
  %198 = vmatprep.subr.bf16.mxu0 0
  %199 = vmatpush1.bf16.msra.mxu0 %v173
  %200 = vmatprep.subr.bf16.mxu0 0
  %201 = vmatpush1.bf16.msra.mxu0 %v172
  %202 = vmatprep.subr.bf16.mxu0 0
  %203 = vmatpush1.bf16.msra.mxu0 %v171
  %204 = vmatprep.subr.bf16.mxu0 0
  %205 = vmatpush1.bf16.msra.mxu0 %v170
  %206 = vmatprep.subr.bf16.mxu0 0
  %207 = vmatpush1.bf16.msra.mxu0 %v169
  %208 = vmatprep.subr.bf16.mxu0 0
  %209 = vmatpush1.bf16.msra.mxu0 %v168
  %210 = vmatprep.subr.bf16.mxu0 0
  %211 = vmatpush1.bf16.msra.mxu0 %v167
  %212 = vmatprep.subr.bf16.mxu0 0
  %213 = vmatpush1.bf16.msra.mxu0 %v166
  %214 = vmatprep.subr.bf16.mxu0 0
  %215 = vmatpush2.bf16.msra.mxu0 %v181
  %216 = vmatprep.subr.bf16.mxu0 0
  %217 = vmatpush2.bf16.msra.mxu0 %v180
  %218 = vmatprep.subr.bf16.mxu0 0
  %219 = vmatpush2.bf16.msra.mxu0 %v179
  %220 = vmatprep.subr.bf16.mxu0 0
  %221 = vmatpush2.bf16.msra.mxu0 %v178
  %222 = vmatprep.subr.bf16.mxu0 0
  %223 = vmatpush2.bf16.msra.mxu0 %v177
  %224 = vmatprep.subr.bf16.mxu0 0
  %225 = vmatpush2.bf16.msra.mxu0 %v176
  %226 = vmatprep.subr.bf16.mxu0 0
  %227 = vmatpush2.bf16.msra.mxu0 %v175
  %228 = vmatprep.subr.bf16.mxu0 0
  %229 = vmatpush2.bf16.msra.mxu0 %v174
  %230 = vmatprep.mubr.bf16.mxu0 %v48
  %231 = vmatmul.mubr.bf16.gmra.mxu0 %v47
  %v232 = vpop.f32.mrf.mxu0
  %v233 = vadd.f32 %v100, %v232
  %v234 = vpop.f32.mrf.mxu0
  %v235 = vpop.f32.mrf.mxu0
  %v236 = vadd.f32 %v100, %v235
  %v237 = vpop.f32.mrf.mxu0
  %238 = vmatprep.mubr.bf16.mxu0 %v50
  %239 = vmatmul.mubr.bf16.gmra.mxu0 %v49
  %v240 = vpop.f32.mrf.mxu0
  %v241 = vadd.f32 %v100, %v240
  %v242 = vpop.f32.mrf.mxu0
  %v243 = vpop.f32.mrf.mxu0
  %v244 = vadd.f32 %v100, %v243
  %v245 = vpop.f32.mrf.mxu0
  %246 = vmatprep.mubr.bf16.mxu0 %v52
  %247 = vmatmul.mubr.bf16.gmra.mxu0 %v51
  %v248 = vpop.f32.mrf.mxu0
  %v249 = vadd.f32 %v100, %v248
  %v250 = vpop.f32.mrf.mxu0
  %v251 = vpop.f32.mrf.mxu0
  %v252 = vadd.f32 %v100, %v251
  %v253 = vpop.f32.mrf.mxu0
  %254 = vmatprep.mubr.bf16.mxu0 %v54
  %255 = vmatmul.mubr.bf16.gmra.mxu0 %v53
  %v256 = vpop.f32.mrf.mxu0
  %v257 = vadd.f32 %v100, %v256
  %v258 = vpop.f32.mrf.mxu0
  %v259 = vpop.f32.mrf.mxu0
  %v260 = vadd.f32 %v100, %v259
  %v261 = vpop.f32.mrf.mxu0
  %262 = vmatprep.mubr.bf16.mxu0 %v56
  %263 = vmatmul.mubr.bf16.gmra.mxu0 %v55
  %v264 = vpop.f32.mrf.mxu0
  %v265 = vadd.f32 %v100, %v264
  %v266 = vpop.f32.mrf.mxu0
  %v267 = vpop.f32.mrf.mxu0
  %v268 = vadd.f32 %v100, %v267
  %v269 = vpop.f32.mrf.mxu0
  %270 = vmatprep.mubr.bf16.mxu0 %v58
  %271 = vmatmul.mubr.bf16.gmra.mxu0 %v57
  %v272 = vpop.f32.mrf.mxu0
  %v273 = vadd.f32 %v100, %v272
  %v274 = vpop.f32.mrf.mxu0
  %v275 = vpop.f32.mrf.mxu0
  %v276 = vadd.f32 %v100, %v275
  %v277 = vpop.f32.mrf.mxu0
  %278 = vmatprep.mubr.bf16.mxu0 %v60
  %279 = vmatmul.mubr.bf16.gmra.mxu0 %v59
  %v280 = vpop.f32.mrf.mxu0
  %v281 = vadd.f32 %v100, %v280
  %v282 = vpop.f32.mrf.mxu0
  %v283 = vpop.f32.mrf.mxu0
  %v284 = vadd.f32 %v100, %v283
  %v285 = vpop.f32.mrf.mxu0
  %286 = vmatprep.mubr.bf16.mxu0 %v62
  %287 = vmatmul.mubr.bf16.gmra.mxu0 %v61
  %v288 = vpop.f32.mrf.mxu0
  %v289 = vadd.f32 %v100, %v288
  %v290 = vpop.f32.mrf.mxu0
  %v291 = vpop.f32.mrf.mxu0
  %v292 = vadd.f32 %v100, %v291
  %v293 = vpop.f32.mrf.mxu0
  %294 = vdwg.mxu0
  %v295 = vmin.f32 %v233, 20.0
  %v296 = vmin.f32 %v236, 20.0
  %v297 = vmin.f32 %v241, 20.0
  %v298 = vmin.f32 %v244, 20.0
  %v299 = vmin.f32 %v249, 20.0
  %v300 = vmin.f32 %v252, 20.0
  %v301 = vmin.f32 %v257, 20.0
  %v302 = vmin.f32 %v260, 20.0
  %v303 = vmin.f32 %v265, 20.0
  %v304 = vmin.f32 %v268, 20.0
  %v305 = vmin.f32 %v273, 20.0
  %v306 = vmin.f32 %v276, 20.0
  %v307 = vmin.f32 %v281, 20.0
  %v308 = vmin.f32 %v284, 20.0
  %v309 = vmin.f32 %v289, 20.0
  %v310 = vmin.f32 %v292, 20.0
  %v311 = vmul.f32 %v295, 1.442695
  %v312 = vpow.pop %v311
  %v313 = vmul.f32 %v296, 1.442695
  %v314 = vpow.pop %v313
  %v315 = vmul.f32 %v297, 1.442695
  %v316 = vpow.pop %v315
  %v317 = vmul.f32 %v298, 1.442695
  %v318 = vpow.pop %v317
  %v319 = vmul.f32 %v299, 1.442695
  %v320 = vpow.pop %v319
  %v321 = vmul.f32 %v300, 1.442695
  %v322 = vpow.pop %v321
  %v323 = vmul.f32 %v301, 1.442695
  %v324 = vpow.pop %v323
  %v325 = vmul.f32 %v302, 1.442695
  %v326 = vpow.pop %v325
  %v327 = vmul.f32 %v303, 1.442695
  %v328 = vpow.pop %v327
  %v329 = vmul.f32 %v304, 1.442695
  %v330 = vpow.pop %v329
  %v331 = vmul.f32 %v305, 1.442695
  %v332 = vpow.pop %v331
  %v333 = vmul.f32 %v306, 1.442695
  %v334 = vpow.pop %v333
  %v335 = vmul.f32 %v307, 1.442695
  %v336 = vpow.pop %v335
  %v337 = vmul.f32 %v308, 1.442695
  %v338 = vpow.pop %v337
  %v339 = vmul.f32 %v309, 1.442695
  %v340 = vpow.pop %v339
  %v341 = vmul.f32 %v310, 1.442695
  %v342 = vpow.pop %v341
  %v343 = vadd.f32 %v312, 2.0
  %v344 = vadd.f32 %v314, 2.0
  %v345 = vadd.f32 %v316, 2.0
  %v346 = vadd.f32 %v318, 2.0
  %v347 = vadd.f32 %v320, 2.0
  %v348 = vadd.f32 %v322, 2.0
  %v349 = vadd.f32 %v324, 2.0
  %v350 = vadd.f32 %v326, 2.0
  %v351 = vadd.f32 %v328, 2.0
  %v352 = vadd.f32 %v330, 2.0
  %v353 = vadd.f32 %v332, 2.0
  %v354 = vadd.f32 %v334, 2.0
  %v355 = vadd.f32 %v336, 2.0
  %v356 = vadd.f32 %v338, 2.0
  %v357 = vadd.f32 %v340, 2.0
  %v358 = vadd.f32 %v342, 2.0
  %v359 = vmul.f32 %v312, %v343
  %v360 = vmul.f32 %v314, %v344
  %v361 = vmul.f32 %v316, %v345
  %v362 = vmul.f32 %v318, %v346
  %v363 = vmul.f32 %v320, %v347
  %v364 = vmul.f32 %v322, %v348
  %v365 = vmul.f32 %v324, %v349
  %v366 = vmul.f32 %v326, %v350
  %v367 = vmul.f32 %v328, %v351
  %v368 = vmul.f32 %v330, %v352
  %v369 = vmul.f32 %v332, %v353
  %v370 = vmul.f32 %v334, %v354
  %v371 = vmul.f32 %v336, %v355
  %v372 = vmul.f32 %v338, %v356
  %v373 = vmul.f32 %v340, %v357
  %v374 = vmul.f32 %v342, %v358
  %v375 = vmul.f32 %v233, %v359
  %v376 = vmul.f32 %v236, %v360
  %v377 = vmul.f32 %v241, %v361
  %v378 = vmul.f32 %v244, %v362
  %v379 = vmul.f32 %v249, %v363
  %v380 = vmul.f32 %v252, %v364
  %v381 = vmul.f32 %v257, %v365
  %v382 = vmul.f32 %v260, %v366
  %v383 = vmul.f32 %v265, %v367
  %v384 = vmul.f32 %v268, %v368
  %v385 = vmul.f32 %v273, %v369
  %v386 = vmul.f32 %v276, %v370
  %v387 = vmul.f32 %v281, %v371
  %v388 = vmul.f32 %v284, %v372
  %v389 = vmul.f32 %v289, %v373
  %v390 = vmul.f32 %v292, %v374
  %v391 = vadd.f32 %v359, 2.0
  %v392 = vadd.f32 %v360, 2.0
  %v393 = vadd.f32 %v361, 2.0
  %v394 = vadd.f32 %v362, 2.0
  %v395 = vadd.f32 %v363, 2.0
  %v396 = vadd.f32 %v364, 2.0
  %v397 = vadd.f32 %v365, 2.0
  %v398 = vadd.f32 %v366, 2.0
  %v399 = vadd.f32 %v367, 2.0
  %v400 = vadd.f32 %v368, 2.0
  %v401 = vadd.f32 %v369, 2.0
  %v402 = vadd.f32 %v370, 2.0
  %v403 = vadd.f32 %v371, 2.0
  %v404 = vadd.f32 %v372, 2.0
  %v405 = vadd.f32 %v373, 2.0
  %v406 = vadd.f32 %v374, 2.0
  %v407 = vrcp.pop %v391
  %v408 = vrcp.pop %v392
  %v409 = vrcp.pop %v393
  %v410 = vrcp.pop %v394
  %v411 = vrcp.pop %v395
  %v412 = vrcp.pop %v396
  %v413 = vrcp.pop %v397
  %v414 = vrcp.pop %v398
  %v415 = vrcp.pop %v399
  %v416 = vrcp.pop %v400
  %v417 = vrcp.pop %v401
  %v418 = vrcp.pop %v402
  %v419 = vrcp.pop %v403
  %v420 = vrcp.pop %v404
  %v421 = vrcp.pop %v405
  %v422 = vrcp.pop %v406
  %v423 = vmul.f32 %v375, %v407
  %v424 = vmul.f32 %v376, %v408
  %v425 = vmul.f32 %v377, %v409
  %v426 = vmul.f32 %v378, %v410
  %v427 = vmul.f32 %v379, %v411
  %v428 = vmul.f32 %v380, %v412
  %v429 = vmul.f32 %v381, %v413
  %v430 = vmul.f32 %v382, %v414
  %v431 = vmul.f32 %v383, %v415
  %v432 = vmul.f32 %v384, %v416
  %v433 = vmul.f32 %v385, %v417
  %v434 = vmul.f32 %v386, %v418
  %v435 = vmul.f32 %v387, %v419
  %v436 = vmul.f32 %v388, %v420
  %v437 = vmul.f32 %v389, %v421
  %v438 = vmul.f32 %v390, %v422
  %vm439 = vcmask 261120
  %440 = vst.msk [vmem:[%s3] sm:$0xff] %vm439, %v423
  %441 = vst.msk [vmem:[%s3 + $0x8] sm:$0xff] %vm439, %v424
  %442 = vst.msk [vmem:[%s3 + $0x10] sm:$0xff] %vm439, %v425
  %443 = vst.msk [vmem:[%s3 + $0x18] sm:$0xff] %vm439, %v426
  %444 = vst.msk [vmem:[%s3 + $0x20] sm:$0xff] %vm439, %v427
  %445 = vst.msk [vmem:[%s3 + $0x28] sm:$0xff] %vm439, %v428
  %446 = vst.msk [vmem:[%s3 + $0x30] sm:$0xff] %vm439, %v429
  %447 = vst.msk [vmem:[%s3 + $0x38] sm:$0xff] %vm439, %v430
  %448 = vst.msk [vmem:[%s3 + $0x40] sm:$0xff] %vm439, %v431
  %449 = vst.msk [vmem:[%s3 + $0x48] sm:$0xff] %vm439, %v432
  %450 = vst.msk [vmem:[%s3 + $0x50] sm:$0xff] %vm439, %v433
  %451 = vst.msk [vmem:[%s3 + $0x58] sm:$0xff] %vm439, %v434
  %452 = vst.msk [vmem:[%s3 + $0x60] sm:$0xff] %vm439, %v435
  %453 = vst.msk [vmem:[%s3 + $0x68] sm:$0xff] %vm439, %v436
  %454 = vst.msk [vmem:[%s3 + $0x70] sm:$0xff] %vm439, %v437
  %455 = vst.msk [vmem:[%s3 + $0x78] sm:$0xff] %vm439, %v438
  // Predicated region
  $region14: #{rainbow_forward.6} parent=0 // pred_check
    _
  $region15: #{rainbow_forward.6} parent=0 // pred_check_branch
    %457 = sbr.rel (0) target = $region17
  $region16: #{rainbow_forward.6} parent=0 // pred_region
    _
  $region17: #{rainbow_forward.6} parent=0 // pred_fallthru
    _
  // Predicated region
  $region18: #{rainbow_forward.6} parent=0 // pred_check
    _
  $region19: #{rainbow_forward.6} parent=0 // pred_check_branch
    %459 = sbr.rel (0) target = $region21
  $region20: #{rainbow_forward.6} parent=0 // pred_region
    _
  $region21: #{rainbow_forward.6} parent=0 // pred_fallthru
    _

// kernel: rainbow_forward.7
$region0: #{rainbow_forward.7}
  #allocation0 [shape = 'u32[]', space=smem, size = 0x4, offset = 0x4, fixed_abs, tag = 'smem constant byte address 0x4 - core index']
  #allocation1 [shape = 'u32[144,128]{1,0:T(1,128)}', space=vmem, size = 0x12000, scoped, tag = 'internal scratch']
  %s0 = inlined_call_operand.vmem [shape: f32[18,512], index: 0, kind: input, shape index: {}]
  %s1 = inlined_call_operand.vmem [shape: bf16[512,64], index: 1, kind: input, shape index: {}]
  %s2 = inlined_call_operand.vmem [shape: f32[1,64], index: 2, kind: input, shape index: {}]
  %s3 = inlined_call_operand.vmem [shape: f32[18,64], index: 3, kind: output, shape index: {}]
  %s4 = sld [smem:[#allocation0]]
  $region22: #{rainbow_forward.7} parent=0
    _
  %s6 = ssub.s32 1, %s4
  %s7 = scalar_select 0, %s6, %s4
  // Predicated region
  $region2: #{rainbow_forward.7} parent=0 // pred_check
    _
  $region3: #{rainbow_forward.7} parent=0 // pred_check_branch
    %9 = sbr.rel (0) target = $region5
  $region4: #{rainbow_forward.7} parent=0 // pred_region
    _
  $region5: #{rainbow_forward.7} parent=0 // pred_fallthru
    _
  // Predicated region
  $region6: #{rainbow_forward.7} parent=0 // pred_check
    _
  $region7: #{rainbow_forward.7} parent=0 // pred_check_branch
    %11 = sbr.rel (0) target = $region9
  $region8: #{rainbow_forward.7} parent=0 // pred_region
    _
  $region9: #{rainbow_forward.7} parent=0 // pred_fallthru
    _
  // Predicated region
  $region10: #{rainbow_forward.7} parent=0 // pred_check
    _
  $region11: #{rainbow_forward.7} parent=0 // pred_check_branch
    %13 = sbr.rel (0) target = $region13
  $region12: #{rainbow_forward.7} parent=0 // pred_region
    _
  $region13: #{rainbow_forward.7} parent=0 // pred_fallthru
    _
  %v15 = vld [vmem:[%s0] sm:$0xff]
  %v16 = vld [vmem:[%s0 + $0x8] sm:$0xff]
  %v17 = vld [vmem:[%s0 + $0x10] sm:$0xff]
  %v18 = vld [vmem:[%s0 + $0x18] sm:$0xff]
  %v19 = vld [vmem:[%s0 + $0x20] sm:$0xff]
  %v20 = vld [vmem:[%s0 + $0x28] sm:$0xff]
  %v21 = vld [vmem:[%s0 + $0x30] sm:$0xff]
  %v22 = vld [vmem:[%s0 + $0x38] sm:$0xff]
  %v23 = vld [vmem:[%s0 + $0x40] sm:$0x3]
  %v24 = vld [vmem:[%s0 + $0x48] sm:$0x3]
  %v25 = vld [vmem:[%s0 + $0x50] sm:$0x3]
  %v26 = vld [vmem:[%s0 + $0x58] sm:$0x3]
  %v27 = vpack.c.bf16 %v19, %v15
  %v28 = vpack.c.bf16 %v20, %v16
  %v29 = vpack.c.bf16 %v21, %v17
  %v30 = vpack.c.bf16 %v22, %v18
  %v31 = vpack.c.bf16 %v23, %v23
  %v32 = vpack.c.bf16 %v24, %v24
  %v33 = vpack.c.bf16 %v25, %v25
  %v34 = vpack.c.bf16 %v26, %v26
  %v35 = vld [vmem:[%s1] sm:$0xf]
  %v36 = vld [vmem:[%s1 + $0x4] sm:$0xf]
  %v37 = vld [vmem:[%s1 + $0x8] sm:$0xf]
  %v38 = vld [vmem:[%s1 + $0xc] sm:$0xf]
  %v39 = vld [vmem:[%s1 + $0x10] sm:$0xf]
  %v40 = vld [vmem:[%s1 + $0x14] sm:$0xf]
  %v41 = vld [vmem:[%s1 + $0x18] sm:$0xf]
  %v42 = vld [vmem:[%s1 + $0x1c] sm:$0xf]
  %v43 = vld [vmem:[%s1 + $0x20] sm:$0xf]
  %v44 = vld [vmem:[%s1 + $0x24] sm:$0xf]
  %v45 = vld [vmem:[%s1 + $0x28] sm:$0xf]
  %v46 = vld [vmem:[%s1 + $0x2c] sm:$0xf]
  %v47 = vld [vmem:[%s1 + $0x30] sm:$0xf]
  %v48 = vld [vmem:[%s1 + $0x34] sm:$0xf]
  %v49 = vld [vmem:[%s1 + $0x38] sm:$0xf]
  %v50 = vld [vmem:[%s1 + $0x3c] sm:$0xf]
  %v51 = vld [vmem:[%s1 + $0x40] sm:$0xf]
  %v52 = vld [vmem:[%s1 + $0x44] sm:$0xf]
  %v53 = vld [vmem:[%s1 + $0x48] sm:$0xf]
  %v54 = vld [vmem:[%s1 + $0x4c] sm:$0xf]
  %v55 = vld [vmem:[%s1 + $0x50] sm:$0xf]
  %v56 = vld [vmem:[%s1 + $0x54] sm:$0xf]
  %v57 = vld [vmem:[%s1 + $0x58] sm:$0xf]
  %v58 = vld [vmem:[%s1 + $0x5c] sm:$0xf]
  %v59 = vld [vmem:[%s1 + $0x60] sm:$0xf]
  %v60 = vld [vmem:[%s1 + $0x64] sm:$0xf]
  %v61 = vld [vmem:[%s1 + $0x68] sm:$0xf]
  %v62 = vld [vmem:[%s1 + $0x6c] sm:$0xf]
  %v63 = vld [vmem:[%s1 + $0x70] sm:$0xf]
  %v64 = vld [vmem:[%s1 + $0x74] sm:$0xf]
  %v65 = vld [vmem:[%s1 + $0x78] sm:$0xf]
  %v66 = vld [vmem:[%s1 + $0x7c] sm:$0xf]
  %v67 = vld [vmem:[%s1 + $0x80] sm:$0xf]
  %v68 = vld [vmem:[%s1 + $0x84] sm:$0xf]
  %v69 = vld [vmem:[%s1 + $0x88] sm:$0xf]
  %v70 = vld [vmem:[%s1 + $0x8c] sm:$0xf]
  %v71 = vld [vmem:[%s1 + $0x90] sm:$0xf]
  %v72 = vld [vmem:[%s1 + $0x94] sm:$0xf]
  %v73 = vld [vmem:[%s1 + $0x98] sm:$0xf]
  %v74 = vld [vmem:[%s1 + $0x9c] sm:$0xf]
  %v75 = vld [vmem:[%s1 + $0xa0] sm:$0xf]
  %v76 = vld [vmem:[%s1 + $0xa4] sm:$0xf]
  %v77 = vld [vmem:[%s1 + $0xa8] sm:$0xf]
  %v78 = vld [vmem:[%s1 + $0xac] sm:$0xf]
  %v79 = vld [vmem:[%s1 + $0xb0] sm:$0xf]
  %v80 = vld [vmem:[%s1 + $0xb4] sm:$0xf]
  %v81 = vld [vmem:[%s1 + $0xb8] sm:$0xf]
  %v82 = vld [vmem:[%s1 + $0xbc] sm:$0xf]
  %v83 = vld [vmem:[%s1 + $0xc0] sm:$0xf]
  %v84 = vld [vmem:[%s1 + $0xc4] sm:$0xf]
  %v85 = vld [vmem:[%s1 + $0xc8] sm:$0xf]
  %v86 = vld [vmem:[%s1 + $0xcc] sm:$0xf]
  %v87 = vld [vmem:[%s1 + $0xd0] sm:$0xf]
  %v88 = vld [vmem:[%s1 + $0xd4] sm:$0xf]
  %v89 = vld [vmem:[%s1 + $0xd8] sm:$0xf]
  %v90 = vld [vmem:[%s1 + $0xdc] sm:$0xf]
  %v91 = vld [vmem:[%s1 + $0xe0] sm:$0xf]
  %v92 = vld [vmem:[%s1 + $0xe4] sm:$0xf]
  %v93 = vld [vmem:[%s1 + $0xe8] sm:$0xf]
  %v94 = vld [vmem:[%s1 + $0xec] sm:$0xf]
  %v95 = vld [vmem:[%s1 + $0xf0] sm:$0xf]
  %v96 = vld [vmem:[%s1 + $0xf4] sm:$0xf]
  %v97 = vld [vmem:[%s1 + $0xf8] sm:$0xf]
  %v98 = vld [vmem:[%s1 + $0xfc] sm:$0xf]
  %v99 = vld [vmem:[%s2] sm:$0x1]
  %v101 = vlaneseq
  %v102 = vshrl.u32 %v101, 7
  %v103 = vsub.s32 0, %v102
  %v104 = vrot.slane %v99, %v103
  %v170 = vunpack.c.l.b16 %v35
  %v171 = vunpack.c.l.b16 %v36
  %v172 = vunpack.c.l.b16 %v37
  %v173 = vunpack.c.l.b16 %v38
  %v174 = vunpack.c.l.b16 %v39
  %v175 = vunpack.c.l.b16 %v40
  %v176 = vunpack.c.l.b16 %v41
  %v177 = vunpack.c.l.b16 %v42
  %v178 = vunpack.c.l.b16 %v43
  %v179 = vunpack.c.l.b16 %v44
  %v180 = vunpack.c.l.b16 %v45
  %v181 = vunpack.c.l.b16 %v46
  %v182 = vunpack.c.l.b16 %v47
  %v183 = vunpack.c.l.b16 %v48
  %v184 = vunpack.c.l.b16 %v49
  %v185 = vunpack.c.l.b16 %v50
  %v186 = vunpack.c.l.b16 %v51
  %v187 = vunpack.c.l.b16 %v52
  %v188 = vunpack.c.l.b16 %v53
  %v189 = vunpack.c.l.b16 %v54
  %v190 = vunpack.c.l.b16 %v55
  %v191 = vunpack.c.l.b16 %v56
  %v192 = vunpack.c.l.b16 %v57
  %v193 = vunpack.c.l.b16 %v58
  %v194 = vunpack.c.l.b16 %v59
  %v195 = vunpack.c.l.b16 %v60
  %v196 = vunpack.c.l.b16 %v61
  %v197 = vunpack.c.l.b16 %v62
  %v198 = vunpack.c.l.b16 %v63
  %v199 = vunpack.c.l.b16 %v64
  %v200 = vunpack.c.l.b16 %v65
  %v201 = vunpack.c.l.b16 %v66
  %v202 = vunpack.c.l.b16 %v67
  %v203 = vunpack.c.l.b16 %v68
  %v204 = vunpack.c.l.b16 %v69
  %v205 = vunpack.c.l.b16 %v70
  %v206 = vunpack.c.l.b16 %v71
  %v207 = vunpack.c.l.b16 %v72
  %v208 = vunpack.c.l.b16 %v73
  %v209 = vunpack.c.l.b16 %v74
  %v210 = vunpack.c.l.b16 %v75
  %v211 = vunpack.c.l.b16 %v76
  %v212 = vunpack.c.l.b16 %v77
  %v213 = vunpack.c.l.b16 %v78
  %v214 = vunpack.c.l.b16 %v79
  %v215 = vunpack.c.l.b16 %v80
  %v216 = vunpack.c.l.b16 %v81
  %v217 = vunpack.c.l.b16 %v82
  %v218 = vunpack.c.l.b16 %v83
  %v219 = vunpack.c.l.b16 %v84
  %v220 = vunpack.c.l.b16 %v85
  %v221 = vunpack.c.l.b16 %v86
  %v222 = vunpack.c.l.b16 %v87
  %v223 = vunpack.c.l.b16 %v88
  %v224 = vunpack.c.l.b16 %v89
  %v225 = vunpack.c.l.b16 %v90
  %v226 = vunpack.c.l.b16 %v91
  %v227 = vunpack.c.l.b16 %v92
  %v228 = vunpack.c.l.b16 %v93
  %v229 = vunpack.c.l.b16 %v94
  %v230 = vunpack.c.l.b16 %v95
  %v231 = vunpack.c.l.b16 %v96
  %v232 = vunpack.c.l.b16 %v97
  %v233 = vunpack.c.l.b16 %v98
  %v234 = vpack.c.b16 %v171, %v170
  %v235 = vpack.c.b16 %v173, %v172
  %v236 = vpack.c.b16 %v175, %v174
  %v237 = vpack.c.b16 %v177, %v176
  %v238 = vpack.c.b16 %v179, %v178
  %v239 = vpack.c.b16 %v181, %v180
  %v240 = vpack.c.b16 %v183, %v182
  %v241 = vpack.c.b16 %v185, %v184
  %v242 = vpack.c.b16 %v187, %v186
  %v243 = vpack.c.b16 %v189, %v188
  %v244 = vpack.c.b16 %v191, %v190
  %v245 = vpack.c.b16 %v193, %v192
  %v246 = vpack.c.b16 %v195, %v194
  %v247 = vpack.c.b16 %v197, %v196
  %v248 = vpack.c.b16 %v199, %v198
  %v249 = vpack.c.b16 %v201, %v200
  %v250 = vpack.c.b16 %v203, %v202
  %v251 = vpack.c.b16 %v205, %v204
  %v252 = vpack.c.b16 %v207, %v206
  %v253 = vpack.c.b16 %v209, %v208
  %v254 = vpack.c.b16 %v211, %v210
  %v255 = vpack.c.b16 %v213, %v212
  %v256 = vpack.c.b16 %v215, %v214
  %v257 = vpack.c.b16 %v217, %v216
  %v258 = vpack.c.b16 %v219, %v218
  %v259 = vpack.c.b16 %v221, %v220
  %v260 = vpack.c.b16 %v223, %v222
  %v261 = vpack.c.b16 %v225, %v224
  %v262 = vpack.c.b16 %v227, %v226
  %v263 = vpack.c.b16 %v229, %v228
  %v264 = vpack.c.b16 %v231, %v230
  %v265 = vpack.c.b16 %v233, %v232
  %298 = vmatprep.subr.bf16.mxu0 0
  %299 = vmatpush1.bf16.msra.mxu0 %v241
  %300 = vmatprep.subr.bf16.mxu0 0
  %301 = vmatpush1.bf16.msra.mxu0 %v240
  %302 = vmatprep.subr.bf16.mxu0 0
  %303 = vmatpush1.bf16.msra.mxu0 %v239
  %304 = vmatprep.subr.bf16.mxu0 0
  %305 = vmatpush1.bf16.msra.mxu0 %v238
  %306 = vmatprep.subr.bf16.mxu0 0
  %307 = vmatpush1.bf16.msra.mxu0 %v237
  %308 = vmatprep.subr.bf16.mxu0 0
  %309 = vmatpush1.bf16.msra.mxu0 %v236
  %310 = vmatprep.subr.bf16.mxu0 0
  %311 = vmatpush1.bf16.msra.mxu0 %v235
  %312 = vmatprep.subr.bf16.mxu0 0
  %313 = vmatpush1.bf16.msra.mxu0 %v234
  %314 = vmatprep.subr.bf16.mxu0 0
  %315 = vmatpush2.bf16.msra.mxu0 %v249
  %316 = vmatprep.subr.bf16.mxu0 0
  %317 = vmatpush2.bf16.msra.mxu0 %v248
  %318 = vmatprep.subr.bf16.mxu0 0
  %319 = vmatpush2.bf16.msra.mxu0 %v247
  %320 = vmatprep.subr.bf16.mxu0 0
  %321 = vmatpush2.bf16.msra.mxu0 %v246
  %322 = vmatprep.subr.bf16.mxu0 0
  %323 = vmatpush2.bf16.msra.mxu0 %v245
  %324 = vmatprep.subr.bf16.mxu0 0
  %325 = vmatpush2.bf16.msra.mxu0 %v244
  %326 = vmatprep.subr.bf16.mxu0 0
  %327 = vmatpush2.bf16.msra.mxu0 %v243
  %328 = vmatprep.subr.bf16.mxu0 0
  %329 = vmatpush2.bf16.msra.mxu0 %v242
  %330 = vmatprep.mubr.bf16.mxu0 %v28
  %331 = vmatmul.mubr.bf16.gmra.mxu0 %v27
  %v332 = vpop.f32.mrf.mxu0
  %v333 = vadd.f32 %v104, %v332
  %v334 = vpop.f32.mrf.mxu0
  %v335 = vpop.f32.mrf.mxu0
  %v336 = vadd.f32 %v104, %v335
  %v337 = vpop.f32.mrf.mxu0
  %338 = vmatprep.mubr.bf16.mxu0 %v32
  %339 = vmatmul.mubr.bf16.gmra.mxu0 %v31
  %v340 = vpop.f32.mrf.mxu0
  %v341 = vadd.f32 %v104, %v340
  %v342 = vpop.f32.mrf.mxu0
  %v343 = vpop.f32.mrf.mxu0
  %v344 = vpop.f32.mrf.mxu0
  %345 = vdwg.mxu0
  %346 = vmatprep.subr.bf16.mxu0 0
  %347 = vmatpush1.bf16.msra.mxu0 %v257
  %348 = vmatprep.subr.bf16.mxu0 0
  %349 = vmatpush1.bf16.msra.mxu0 %v256
  %350 = vmatprep.subr.bf16.mxu0 0
  %351 = vmatpush1.bf16.msra.mxu0 %v255
  %352 = vmatprep.subr.bf16.mxu0 0
  %353 = vmatpush1.bf16.msra.mxu0 %v254
  %354 = vmatprep.subr.bf16.mxu0 0
  %355 = vmatpush1.bf16.msra.mxu0 %v253
  %356 = vmatprep.subr.bf16.mxu0 0
  %357 = vmatpush1.bf16.msra.mxu0 %v252
  %358 = vmatprep.subr.bf16.mxu0 0
  %359 = vmatpush1.bf16.msra.mxu0 %v251
  %360 = vmatprep.subr.bf16.mxu0 0
  %361 = vmatpush1.bf16.msra.mxu0 %v250
  %362 = vmatprep.subr.bf16.mxu0 0
  %363 = vmatpush2.bf16.msra.mxu0 %v265
  %364 = vmatprep.subr.bf16.mxu0 0
  %365 = vmatpush2.bf16.msra.mxu0 %v264
  %366 = vmatprep.subr.bf16.mxu0 0
  %367 = vmatpush2.bf16.msra.mxu0 %v263
  %368 = vmatprep.subr.bf16.mxu0 0
  %369 = vmatpush2.bf16.msra.mxu0 %v262
  %370 = vmatprep.subr.bf16.mxu0 0
  %371 = vmatpush2.bf16.msra.mxu0 %v261
  %372 = vmatprep.subr.bf16.mxu0 0
  %373 = vmatpush2.bf16.msra.mxu0 %v260
  %374 = vmatprep.subr.bf16.mxu0 0
  %375 = vmatpush2.bf16.msra.mxu0 %v259
  %376 = vmatprep.subr.bf16.mxu0 0
  %377 = vmatpush2.bf16.msra.mxu0 %v258
  %378 = vmatprep.mubr.bf16.mxu0 %v30
  %379 = vmatmul.mubr.bf16.gmra.mxu0 %v29
  %v380 = vpop.f32.mrf.mxu0
  %v381 = vadd.f32 %v333, %v380
  %v382 = vpop.f32.mrf.mxu0
  %v383 = vpop.f32.mrf.mxu0
  %v384 = vadd.f32 %v336, %v383
  %v385 = vpop.f32.mrf.mxu0
  %386 = vmatprep.mubr.bf16.mxu0 %v34
  %387 = vmatmul.mubr.bf16.gmra.mxu0 %v33
  %v388 = vpop.f32.mrf.mxu0
  %v389 = vadd.f32 %v341, %v388
  %v390 = vpop.f32.mrf.mxu0
  %v391 = vpop.f32.mrf.mxu0
  %v392 = vpop.f32.mrf.mxu0
  %393 = vdwg.mxu0
  %v394 = vmin.f32 %v381, 20.0
  %v395 = vmin.f32 %v384, 20.0
  %v396 = vmin.f32 %v389, 20.0
  %v397 = vmul.f32 %v394, 1.442695
  %v398 = vpow.pop %v397
  %v399 = vmul.f32 %v395, 1.442695
  %v400 = vpow.pop %v399
  %v401 = vmul.f32 %v396, 1.442695
  %v402 = vpow.pop %v401
  %v403 = vadd.f32 %v398, 2.0
  %v404 = vadd.f32 %v400, 2.0
  %v405 = vadd.f32 %v402, 2.0
  %v406 = vmul.f32 %v398, %v403
  %v407 = vmul.f32 %v400, %v404
  %v408 = vmul.f32 %v402, %v405
  %v409 = vmul.f32 %v381, %v406
  %v410 = vmul.f32 %v384, %v407
  %v411 = vmul.f32 %v389, %v408
  %v412 = vadd.f32 %v406, 2.0
  %v413 = vadd.f32 %v407, 2.0
  %v414 = vadd.f32 %v408, 2.0
  %v415 = vrcp.pop %v412
  %v416 = vrcp.pop %v413
  %v417 = vrcp.pop %v414
  %v418 = vmul.f32 %v409, %v415
  %v419 = vmul.f32 %v410, %v416
  %v420 = vmul.f32 %v411, %v417
  %vm421 = vcmask 523264
  %422 = vst.msk [vmem:[%s3] sm:$0xff] %vm421, %v418
  %423 = vst.msk [vmem:[%s3 + $0x8] sm:$0xff] %vm421, %v419
  %vm424 = vcmask 517120
  %425 = vst.msk [vmem:[%s3 + $0x10] sm:$0x3] %vm424, %v420
  // Predicated region
  $region14: #{rainbow_forward.7} parent=0 // pred_check
    _
  $region15: #{rainbow_forward.7} parent=0 // pred_check_branch
    %427 = sbr.rel (0) target = $region17
  $region16: #{rainbow_forward.7} parent=0 // pred_region
    _
  $region17: #{rainbow_forward.7} parent=0 // pred_fallthru
    _
  // Predicated region
  $region18: #{rainbow_forward.7} parent=0 // pred_check
    _
  $region19: #{rainbow_forward.7} parent=0 // pred_check_branch
    %429 = sbr.rel (0) target = $region21
  $region20: #{rainbow_forward.7} parent=0 // pred_region
    _
  $region21: #{rainbow_forward.7} parent=0 // pred_fallthru
    _

// kernel: rainbow_forward.8
$region0: #{rainbow_forward.8}
  #allocation0 [shape = 'u32[]', space=smem, size = 0x4, offset = 0x4, fixed_abs, tag = 'smem constant byte address 0x4 - core index']
  #allocation1 [shape = 'u32[144,128]{1,0:T(1,128)}', space=vmem, size = 0x12000, scoped, tag = 'internal scratch']
  %s0 = inlined_call_operand.vmem [shape: f32[2,576], index: 0, kind: input, shape index: {}]
  %s1 = inlined_call_operand.vmem [shape: bf16[576,64], index: 1, kind: input, shape index: {}]
  %s2 = inlined_call_operand.vmem [shape: f32[1,64], index: 2, kind: input, shape index: {}]
  %s3 = inlined_call_operand.vmem [shape: f32[2,64], index: 3, kind: output, shape index: {}]
  %s4 = sld [smem:[#allocation0]]
  $region22: #{rainbow_forward.8} parent=0
    _
  %s6 = ssub.s32 1, %s4
  %s7 = scalar_select 0, %s6, %s4
  // Predicated region
  $region2: #{rainbow_forward.8} parent=0 // pred_check
    _
  $region3: #{rainbow_forward.8} parent=0 // pred_check_branch
    %9 = sbr.rel (0) target = $region5
  $region4: #{rainbow_forward.8} parent=0 // pred_region
    _
  $region5: #{rainbow_forward.8} parent=0 // pred_fallthru
    _
  // Predicated region
  $region6: #{rainbow_forward.8} parent=0 // pred_check
    _
  $region7: #{rainbow_forward.8} parent=0 // pred_check_branch
    %11 = sbr.rel (0) target = $region9
  $region8: #{rainbow_forward.8} parent=0 // pred_region
    _
  $region9: #{rainbow_forward.8} parent=0 // pred_fallthru
    _
  // Predicated region
  $region10: #{rainbow_forward.8} parent=0 // pred_check
    _
  $region11: #{rainbow_forward.8} parent=0 // pred_check_branch
    %13 = sbr.rel (0) target = $region13
  $region12: #{rainbow_forward.8} parent=0 // pred_region
    _
  $region13: #{rainbow_forward.8} parent=0 // pred_fallthru
    _
  %v15 = vld [vmem:[%s0] sm:$0xff]
  %v16 = vld [vmem:[%s0 + $0x8] sm:$0x3]
  %v19 = vcombine.high %v15, %v15
  %v21 = vunpack.c.l.s4 1983009808
  %v22 = vunpack.c.0.s8 %v21
  %v23 = vlaneseq
  %v24 = vshrl.u32 %v23, 7
  %v25 = vsub.s32 %v22, %v24
  %v26 = vrot.slane %v15, %v25
  %v28 = vunpack.c.l.s4 1983009808
  %v29 = vunpack.c.0.s8 %v28
  %v30 = vlaneseq
  %v31 = vshrl.u32 %v30, 7
  %v32 = vsub.s32 %v29, %v31
  %v33 = vrot.slane %v19, %v32
  %v34 = vcombine.high %v26, %v26
  %v35 = vcombine.high %v33, %v33
  %v37 = vunpack.c.l.s4 1983009808
  %v38 = vunpack.c.0.s8 %v37
  %v39 = vlaneseq
  %v40 = vshrl.u32 %v39, 7
  %v41 = vsub.s32 %v38, %v40
  %v42 = vrot.slane %v16, %v41
  %v48 = vpack.c.bf16 %v26, %v26
  %v49 = vpack.c.bf16 %v34, %v34
  %v50 = vpack.c.bf16 %v33, %v33
  %v51 = vpack.c.bf16 %v35, %v35
  %v52 = vpack.c.bf16 %v42, %v42
  %v53 = vld [vmem:[%s1] sm:$0xf]
  %v54 = vld [vmem:[%s1 + $0x4] sm:$0xf]
  %v55 = vld [vmem:[%s1 + $0x8] sm:$0xf]
  %v56 = vld [vmem:[%s1 + $0xc] sm:$0xf]
  %v57 = vld [vmem:[%s1 + $0x10] sm:$0xf]
  %v58 = vld [vmem:[%s1 + $0x14] sm:$0xf]
  %v59 = vld [vmem:[%s1 + $0x18] sm:$0xf]
  %v60 = vld [vmem:[%s1 + $0x1c] sm:$0xf]
  %v61 = vld [vmem:[%s1 + $0x20] sm:$0xf]
  %v62 = vld [vmem:[%s1 + $0x24] sm:$0xf]
  %v63 = vld [vmem:[%s1 + $0x28] sm:$0xf]
  %v64 = vld [vmem:[%s1 + $0x2c] sm:$0xf]
  %v65 = vld [vmem:[%s1 + $0x30] sm:$0xf]
  %v66 = vld [vmem:[%s1 + $0x34] sm:$0xf]
  %v67 = vld [vmem:[%s1 + $0x38] sm:$0xf]
  %v68 = vld [vmem:[%s1 + $0x3c] sm:$0xf]
  %v69 = vld [vmem:[%s1 + $0x40] sm:$0xf]
  %v70 = vld [vmem:[%s1 + $0x44] sm:$0xf]
  %v71 = vld [vmem:[%s1 + $0x48] sm:$0xf]
  %v72 = vld [vmem:[%s1 + $0x4c] sm:$0xf]
  %v73 = vld [vmem:[%s1 + $0x50] sm:$0xf]
  %v74 = vld [vmem:[%s1 + $0x54] sm:$0xf]
  %v75 = vld [vmem:[%s1 + $0x58] sm:$0xf]
  %v76 = vld [vmem:[%s1 + $0x5c] sm:$0xf]
  %v77 = vld [vmem:[%s1 + $0x60] sm:$0xf]
  %v78 = vld [vmem:[%s1 + $0x64] sm:$0xf]
  %v79 = vld [vmem:[%s1 + $0x68] sm:$0xf]
  %v80 = vld [vmem:[%s1 + $0x6c] sm:$0xf]
  %v81 = vld [vmem:[%s1 + $0x70] sm:$0xf]
  %v82 = vld [vmem:[%s1 + $0x74] sm:$0xf]
  %v83 = vld [vmem:[%s1 + $0x78] sm:$0xf]
  %v84 = vld [vmem:[%s1 + $0x7c] sm:$0xf]
  %v85 = vld [vmem:[%s1 + $0x80] sm:$0xf]
  %v86 = vld [vmem:[%s1 + $0x84] sm:$0xf]
  %v87 = vld [vmem:[%s1 + $0x88] sm:$0xf]
  %v88 = vld [vmem:[%s1 + $0x8c] sm:$0xf]
  %v89 = vld [vmem:[%s1 + $0x90] sm:$0xf]
  %v90 = vld [vmem:[%s1 + $0x94] sm:$0xf]
  %v91 = vld [vmem:[%s1 + $0x98] sm:$0xf]
  %v92 = vld [vmem:[%s1 + $0x9c] sm:$0xf]
  %v93 = vld [vmem:[%s1 + $0xa0] sm:$0xf]
  %v94 = vld [vmem:[%s1 + $0xa4] sm:$0xf]
  %v95 = vld [vmem:[%s1 + $0xa8] sm:$0xf]
  %v96 = vld [vmem:[%s1 + $0xac] sm:$0xf]
  %v97 = vld [vmem:[%s1 + $0xb0] sm:$0xf]
  %v98 = vld [vmem:[%s1 + $0xb4] sm:$0xf]
  %v99 = vld [vmem:[%s1 + $0xb8] sm:$0xf]
  %v100 = vld [vmem:[%s1 + $0xbc] sm:$0xf]
  %v101 = vld [vmem:[%s1 + $0xc0] sm:$0xf]
  %v102 = vld [vmem:[%s1 + $0xc4] sm:$0xf]
  %v103 = vld [vmem:[%s1 + $0xc8] sm:$0xf]
  %v104 = vld [vmem:[%s1 + $0xcc] sm:$0xf]
  %v105 = vld [vmem:[%s1 + $0xd0] sm:$0xf]
  %v106 = vld [vmem:[%s1 + $0xd4] sm:$0xf]
  %v107 = vld [vmem:[%s1 + $0xd8] sm:$0xf]
  %v108 = vld [vmem:[%s1 + $0xdc] sm:$0xf]
  %v109 = vld [vmem:[%s1 + $0xe0] sm:$0xf]
  %v110 = vld [vmem:[%s1 + $0xe4] sm:$0xf]
  %v111 = vld [vmem:[%s1 + $0xe8] sm:$0xf]
  %v112 = vld [vmem:[%s1 + $0xec] sm:$0xf]
  %v113 = vld [vmem:[%s1 + $0xf0] sm:$0xf]
  %v114 = vld [vmem:[%s1 + $0xf4] sm:$0xf]
  %v115 = vld [vmem:[%s1 + $0xf8] sm:$0xf]
  %v116 = vld [vmem:[%s1 + $0xfc] sm:$0xf]
  %v117 = vld [vmem:[%s1 + $0x100] sm:$0xf]
  %v118 = vld [vmem:[%s1 + $0x104] sm:$0xf]
  %v119 = vld [vmem:[%s1 + $0x108] sm:$0xf]
  %v120 = vld [vmem:[%s1 + $0x10c] sm:$0xf]
  %v121 = vld [vmem:[%s1 + $0x110] sm:$0xf]
  %v122 = vld [vmem:[%s1 + $0x114] sm:$0xf]
  %v123 = vld [vmem:[%s1 + $0x118] sm:$0xf]
  %v124 = vld [vmem:[%s1 + $0x11c] sm:$0xf]
  %v125 = vld [vmem:[%s2] sm:$0x1]
  %v127 = vlaneseq
  %v128 = vshrl.u32 %v127, 7
  %v129 = vsub.s32 0, %v128
  %v130 = vrot.slane %v125, %v129
  %v204 = vunpack.c.l.b16 %v53
  %v205 = vunpack.c.l.b16 %v54
  %v206 = vunpack.c.l.b16 %v55
  %v207 = vunpack.c.l.b16 %v56
  %v208 = vunpack.c.l.b16 %v57
  %v209 = vunpack.c.l.b16 %v58
  %v210 = vunpack.c.l.b16 %v59
  %v211 = vunpack.c.l.b16 %v60
  %v212 = vunpack.c.l.b16 %v61
  %v213 = vunpack.c.l.b16 %v62
  %v214 = vunpack.c.l.b16 %v63
  %v215 = vunpack.c.l.b16 %v64
  %v216 = vunpack.c.l.b16 %v65
  %v217 = vunpack.c.l.b16 %v66
  %v218 = vunpack.c.l.b16 %v67
  %v219 = vunpack.c.l.b16 %v68
  %v220 = vunpack.c.l.b16 %v69
  %v221 = vunpack.c.l.b16 %v70
  %v222 = vunpack.c.l.b16 %v71
  %v223 = vunpack.c.l.b16 %v72
  %v224 = vunpack.c.l.b16 %v73
  %v225 = vunpack.c.l.b16 %v74
  %v226 = vunpack.c.l.b16 %v75
  %v227 = vunpack.c.l.b16 %v76
  %v228 = vunpack.c.l.b16 %v77
  %v229 = vunpack.c.l.b16 %v78
  %v230 = vunpack.c.l.b16 %v79
  %v231 = vunpack.c.l.b16 %v80
  %v232 = vunpack.c.l.b16 %v81
  %v233 = vunpack.c.l.b16 %v82
  %v234 = vunpack.c.l.b16 %v83
  %v235 = vunpack.c.l.b16 %v84
  %v236 = vunpack.c.l.b16 %v85
  %v237 = vunpack.c.l.b16 %v86
  %v238 = vunpack.c.l.b16 %v87
  %v239 = vunpack.c.l.b16 %v88
  %v240 = vunpack.c.l.b16 %v89
  %v241 = vunpack.c.l.b16 %v90
  %v242 = vunpack.c.l.b16 %v91
  %v243 = vunpack.c.l.b16 %v92
  %v244 = vunpack.c.l.b16 %v93
  %v245 = vunpack.c.l.b16 %v94
  %v246 = vunpack.c.l.b16 %v95
  %v247 = vunpack.c.l.b16 %v96
  %v248 = vunpack.c.l.b16 %v97
  %v249 = vunpack.c.l.b16 %v98
  %v250 = vunpack.c.l.b16 %v99
  %v251 = vunpack.c.l.b16 %v100
  %v252 = vunpack.c.l.b16 %v101
  %v253 = vunpack.c.l.b16 %v102
  %v254 = vunpack.c.l.b16 %v103
  %v255 = vunpack.c.l.b16 %v104
  %v256 = vunpack.c.l.b16 %v105
  %v257 = vunpack.c.l.b16 %v106
  %v258 = vunpack.c.l.b16 %v107
  %v259 = vunpack.c.l.b16 %v108
  %v260 = vunpack.c.l.b16 %v109
  %v261 = vunpack.c.l.b16 %v110
  %v262 = vunpack.c.l.b16 %v111
  %v263 = vunpack.c.l.b16 %v112
  %v264 = vunpack.c.l.b16 %v113
  %v265 = vunpack.c.l.b16 %v114
  %v266 = vunpack.c.l.b16 %v115
  %v267 = vunpack.c.l.b16 %v116
  %v268 = vunpack.c.l.b16 %v117
  %v269 = vunpack.c.l.b16 %v118
  %v270 = vunpack.c.l.b16 %v119
  %v271 = vunpack.c.l.b16 %v120
  %v272 = vunpack.c.l.b16 %v121
  %v273 = vunpack.c.l.b16 %v122
  %v274 = vunpack.c.l.b16 %v123
  %v275 = vunpack.c.l.b16 %v124
  %v276 = vpack.c.b16 %v205, %v204
  %v277 = vpack.c.b16 %v207, %v206
  %v278 = vpack.c.b16 %v209, %v208
  %v279 = vpack.c.b16 %v211, %v210
  %v280 = vpack.c.b16 %v213, %v212
  %v281 = vpack.c.b16 %v215, %v214
  %v282 = vpack.c.b16 %v217, %v216
  %v283 = vpack.c.b16 %v219, %v218
  %v284 = vpack.c.b16 %v221, %v220
  %v285 = vpack.c.b16 %v223, %v222
  %v286 = vpack.c.b16 %v225, %v224
  %v287 = vpack.c.b16 %v227, %v226
  %v288 = vpack.c.b16 %v229, %v228
  %v289 = vpack.c.b16 %v231, %v230
  %v290 = vpack.c.b16 %v233, %v232
  %v291 = vpack.c.b16 %v235, %v234
  %v292 = vpack.c.b16 %v237, %v236
  %v293 = vpack.c.b16 %v239, %v238
  %v294 = vpack.c.b16 %v241, %v240
  %v295 = vpack.c.b16 %v243, %v242
  %v296 = vpack.c.b16 %v245, %v244
  %v297 = vpack.c.b16 %v247, %v246
  %v298 = vpack.c.b16 %v249, %v248
  %v299 = vpack.c.b16 %v251, %v250
  %v300 = vpack.c.b16 %v253, %v252
  %v301 = vpack.c.b16 %v255, %v254
  %v302 = vpack.c.b16 %v257, %v256
  %v303 = vpack.c.b16 %v259, %v258
  %v304 = vpack.c.b16 %v261, %v260
  %v305 = vpack.c.b16 %v263, %v262
  %v306 = vpack.c.b16 %v265, %v264
  %v307 = vpack.c.b16 %v267, %v266
  %v308 = vpack.c.b16 %v269, %v268
  %v309 = vpack.c.b16 %v271, %v270
  %v310 = vpack.c.b16 %v273, %v272
  %v311 = vpack.c.b16 %v275, %v274
  %vm348 = vcmask 523264
  %v350 = vsel %vm348, %v52, 0
  %352 = vmatprep.subr.bf16.mxu0 0
  %353 = vmatpush1.bf16.msra.mxu0 %v283
  %354 = vmatprep.subr.bf16.mxu0 0
  %355 = vmatpush1.bf16.msra.mxu0 %v282
  %356 = vmatprep.subr.bf16.mxu0 0
  %357 = vmatpush1.bf16.msra.mxu0 %v281
  %358 = vmatprep.subr.bf16.mxu0 0
  %359 = vmatpush1.bf16.msra.mxu0 %v280
  %360 = vmatprep.subr.bf16.mxu0 0
  %361 = vmatpush1.bf16.msra.mxu0 %v279
  %362 = vmatprep.subr.bf16.mxu0 0
  %363 = vmatpush1.bf16.msra.mxu0 %v278
  %364 = vmatprep.subr.bf16.mxu0 0
  %365 = vmatpush1.bf16.msra.mxu0 %v277
  %366 = vmatprep.subr.bf16.mxu0 0
  %367 = vmatpush1.bf16.msra.mxu0 %v276
  %368 = vmatprep.subr.bf16.mxu0 0
  %369 = vmatpush2.bf16.msra.mxu0 %v291
  %370 = vmatprep.subr.bf16.mxu0 0
  %371 = vmatpush2.bf16.msra.mxu0 %v290
  %372 = vmatprep.subr.bf16.mxu0 0
  %373 = vmatpush2.bf16.msra.mxu0 %v289
  %374 = vmatprep.subr.bf16.mxu0 0
  %375 = vmatpush2.bf16.msra.mxu0 %v288
  %376 = vmatprep.subr.bf16.mxu0 0
  %377 = vmatpush2.bf16.msra.mxu0 %v287
  %378 = vmatprep.subr.bf16.mxu0 0
  %379 = vmatpush2.bf16.msra.mxu0 %v286
  %380 = vmatprep.subr.bf16.mxu0 0
  %381 = vmatpush2.bf16.msra.mxu0 %v285
  %382 = vmatprep.subr.bf16.mxu0 0
  %383 = vmatpush2.bf16.msra.mxu0 %v284
  %384 = vmatprep.mubr.bf16.mxu0 %v49
  %385 = vmatmul.mubr.bf16.gmra.mxu0 %v48
  %v386 = vpop.f32.mrf.mxu0
  %v387 = vadd.f32 %v130, %v386
  %v388 = vpop.f32.mrf.mxu0
  %v389 = vpop.f32.mrf.mxu0
  %v390 = vpop.f32.mrf.mxu0
  %391 = vdwg.mxu0
  %392 = vmatprep.subr.bf16.mxu0 0
  %393 = vmatpush1.bf16.msra.mxu0 %v299
  %394 = vmatprep.subr.bf16.mxu0 0
  %395 = vmatpush1.bf16.msra.mxu0 %v298
  %396 = vmatprep.subr.bf16.mxu0 0
  %397 = vmatpush1.bf16.msra.mxu0 %v297
  %398 = vmatprep.subr.bf16.mxu0 0
  %399 = vmatpush1.bf16.msra.mxu0 %v296
  %400 = vmatprep.subr.bf16.mxu0 0
  %401 = vmatpush1.bf16.msra.mxu0 %v295
  %402 = vmatprep.subr.bf16.mxu0 0
  %403 = vmatpush1.bf16.msra.mxu0 %v294
  %404 = vmatprep.subr.bf16.mxu0 0
  %405 = vmatpush1.bf16.msra.mxu0 %v293
  %406 = vmatprep.subr.bf16.mxu0 0
  %407 = vmatpush1.bf16.msra.mxu0 %v292
  %408 = vmatprep.subr.bf16.mxu0 0
  %409 = vmatpush2.bf16.msra.mxu0 %v307
  %410 = vmatprep.subr.bf16.mxu0 0
  %411 = vmatpush2.bf16.msra.mxu0 %v306
  %412 = vmatprep.subr.bf16.mxu0 0
  %413 = vmatpush2.bf16.msra.mxu0 %v305
  %414 = vmatprep.subr.bf16.mxu0 0
  %415 = vmatpush2.bf16.msra.mxu0 %v304
  %416 = vmatprep.subr.bf16.mxu0 0
  %417 = vmatpush2.bf16.msra.mxu0 %v303
  %418 = vmatprep.subr.bf16.mxu0 0
  %419 = vmatpush2.bf16.msra.mxu0 %v302
  %420 = vmatprep.subr.bf16.mxu0 0
  %421 = vmatpush2.bf16.msra.mxu0 %v301
  %422 = vmatprep.subr.bf16.mxu0 0
  %423 = vmatpush2.bf16.msra.mxu0 %v300
  %424 = vmatprep.mubr.bf16.mxu0 %v51
  %425 = vmatmul.mubr.bf16.gmra.mxu0 %v50
  %v426 = vpop.f32.mrf.mxu0
  %v427 = vadd.f32 %v387, %v426
  %v428 = vpop.f32.mrf.mxu0
  %v429 = vpop.f32.mrf.mxu0
  %v430 = vpop.f32.mrf.mxu0
  %431 = vdwg.mxu0
  %432 = vmatprep.subr.bf16.mxu0 0
  %433 = vmatpush1.bf16.msra.mxu0 0
  %434 = vmatprep.subr.bf16.mxu0 0
  %435 = vmatpush1.bf16.msra.mxu0 0
  %436 = vmatprep.subr.bf16.mxu0 0
  %437 = vmatpush1.bf16.msra.mxu0 0
  %438 = vmatprep.subr.bf16.mxu0 0
  %439 = vmatpush1.bf16.msra.mxu0 0
  %440 = vmatprep.subr.bf16.mxu0 0
  %441 = vmatpush1.bf16.msra.mxu0 %v311
  %442 = vmatprep.subr.bf16.mxu0 0
  %443 = vmatpush1.bf16.msra.mxu0 %v310
  %444 = vmatprep.subr.bf16.mxu0 0
  %445 = vmatpush1.bf16.msra.mxu0 %v309
  %446 = vmatprep.subr.bf16.mxu0 0
  %447 = vmatpush1.bf16.msra.mxu0 %v308
  %448 = vmatprep.subr.bf16.mxu0 0
  %449 = vmatpush2.bf16.msra.mxu0 0
  %450 = vmatprep.subr.bf16.mxu0 0
  %451 = vmatpush2.bf16.msra.mxu0 0
  %452 = vmatprep.subr.bf16.mxu0 0
  %453 = vmatpush2.bf16.msra.mxu0 0
  %454 = vmatprep.subr.bf16.mxu0 0
  %455 = vmatpush2.bf16.msra.mxu0 0
  %456 = vmatprep.subr.bf16.mxu0 0
  %457 = vmatpush2.bf16.msra.mxu0 0
  %458 = vmatprep.subr.bf16.mxu0 0
  %459 = vmatpush2.bf16.msra.mxu0 0
  %460 = vmatprep.subr.bf16.mxu0 0
  %461 = vmatpush2.bf16.msra.mxu0 0
  %462 = vmatprep.subr.bf16.mxu0 0
  %463 = vmatpush2.bf16.msra.mxu0 0
  %464 = vmatprep.mubr.bf16.mxu0 0
  %465 = vmatmul.mubr.bf16.gmra.mxu0 %v350
  %v466 = vpop.f32.mrf.mxu0
  %v467 = vadd.f32 %v427, %v466
  %v468 = vpop.f32.mrf.mxu0
  %v469 = vpop.f32.mrf.mxu0
  %v470 = vpop.f32.mrf.mxu0
  %471 = vdwg.mxu0
  %v472 = vmin.f32 %v467, 20.0
  %v473 = vmul.f32 %v472, 1.442695
  %v474 = vpow.pop %v473
  %v475 = vadd.f32 %v474, 2.0
  %v476 = vmul.f32 %v474, %v475
  %v477 = vmul.f32 %v467, %v476
  %v478 = vadd.f32 %v476, 2.0
  %v479 = vrcp.pop %v478
  %v480 = vmul.f32 %v477, %v479
  %vm481 = vcmask 517120
  %482 = vst.msk [vmem:[%s3] sm:$0x3] %vm481, %v480
  // Predicated region
  $region14: #{rainbow_forward.8} parent=0 // pred_check
    _
  $region15: #{rainbow_forward.8} parent=0 // pred_check_branch
    %484 = sbr.rel (0) target = $region17
  $region16: #{rainbow_forward.8} parent=0 // pred_region
    _
  $region17: #{rainbow_forward.8} parent=0 // pred_fallthru
    _
  // Predicated region
  $region18: #{rainbow_forward.8} parent=0 // pred_check
    _
  $region19: #{rainbow_forward.8} parent=0 // pred_check_branch
    %486 = sbr.rel (0) target = $region21
  $region20: #{rainbow_forward.8} parent=0 // pred_region
    _
  $region21: #{rainbow_forward.8} parent=0 // pred_fallthru
    _

// kernel: rainbow_forward.9
$region0: #{rainbow_forward.9}
  #allocation0 [shape = 'u32[]', space=smem, size = 0x4, offset = 0x4, fixed_abs, tag = 'smem constant byte address 0x4 - core index']
  #allocation1 [shape = 'u32[144,128]{1,0:T(1,128)}', space=vmem, size = 0x12000, scoped, tag = 'internal scratch']
  %s0 = inlined_call_operand.vmem [shape: f32[2,64], index: 0, kind: input, shape index: {}]
  %s1 = inlined_call_operand.vmem [shape: bf16[64,512], index: 1, kind: input, shape index: {}]
  %s2 = inlined_call_operand.vmem [shape: f32[1,512], index: 2, kind: input, shape index: {}]
  %s3 = inlined_call_operand.vmem [shape: bf16[512,7], index: 3, kind: input, shape index: {}]
  %s4 = inlined_call_operand.vmem [shape: f32[1,7], index: 4, kind: input, shape index: {}]
  %s5 = inlined_call_operand.hbm [shape: f32[2,6], index: 5, kind: output, shape index: {}]
  %s6 = sld [smem:[#allocation0]]
  $region30: #{rainbow_forward.9} parent=0
    _
  %s8 = ssub.s32 1, %s6
  %s9 = scalar_select 0, %s8, %s6
  $region1: #{rainbow_forward.9} parent=0
    #allocation2 [shape = 'u8[1024]{0}', space=vmem, size = 0x400, scoped, tag = 'output window, operand 0, single buffered']
    #allocation3 [shape = 's32[1]{0}', space=sflag, size = 0x4, scoped, tag = 'scoped memory for rainbow_forward.9']
    %10 = vsyncpa [#allocation3], 0
    // Predicated region
    $region2: #{rainbow_forward.9} parent=1 // pred_check
      _
    $region3: #{rainbow_forward.9} parent=1 // pred_check_branch
      %12 = sbr.rel (0) target = $region5
    $region4: #{rainbow_forward.9} parent=1 // pred_region
      _
    $region5: #{rainbow_forward.9} parent=1 // pred_fallthru
      _
    // Predicated region
    $region6: #{rainbow_forward.9} parent=1 // pred_check
      _
    $region7: #{rainbow_forward.9} parent=1 // pred_check_branch
      %14 = sbr.rel (0) target = $region9
    $region8: #{rainbow_forward.9} parent=1 // pred_region
      _
    $region9: #{rainbow_forward.9} parent=1 // pred_fallthru
      _
    // Predicated region
    $region10: #{rainbow_forward.9} parent=1 // pred_check
      _
    $region11: #{rainbow_forward.9} parent=1 // pred_check_branch
      %16 = sbr.rel (0) target = $region13
    $region12: #{rainbow_forward.9} parent=1 // pred_region
      _
    $region13: #{rainbow_forward.9} parent=1 // pred_fallthru
      _
    // Predicated region
    $region14: #{rainbow_forward.9} parent=1 // pred_check
      _
    $region15: #{rainbow_forward.9} parent=1 // pred_check_branch
      %18 = sbr.rel (0) target = $region17
    $region16: #{rainbow_forward.9} parent=1 // pred_region
      _
    $region17: #{rainbow_forward.9} parent=1 // pred_fallthru
      _
    // Predicated region
    $region18: #{rainbow_forward.9} parent=1 // pred_check
      _
    $region19: #{rainbow_forward.9} parent=1 // pred_check_branch
      %20 = sbr.rel (0) target = $region21
    $region20: #{rainbow_forward.9} parent=1 // pred_region
      _
    $region21: #{rainbow_forward.9} parent=1 // pred_fallthru
      _
    %v22 = vld [vmem:[%s0] sm:$0x3]
    %v23 = vpack.c.bf16 %v22, %v22
    %v24 = vld [vmem:[%s1] sm:$0xff]
    %v25 = vld [vmem:[%s1 + $0x8] sm:$0xff]
    %v26 = vld [vmem:[%s1 + $0x10] sm:$0xff]
    %v27 = vld [vmem:[%s1 + $0x18] sm:$0xff]
    %v28 = vld [vmem:[%s1 + $0x20] sm:$0xff]
    %v29 = vld [vmem:[%s1 + $0x28] sm:$0xff]
    %v30 = vld [vmem:[%s1 + $0x30] sm:$0xff]
    %v31 = vld [vmem:[%s1 + $0x38] sm:$0xff]
    %v32 = vld [vmem:[%s1 + $0x40] sm:$0xff]
    %v33 = vld [vmem:[%s1 + $0x48] sm:$0xff]
    %v34 = vld [vmem:[%s1 + $0x50] sm:$0xff]
    %v35 = vld [vmem:[%s1 + $0x58] sm:$0xff]
    %v36 = vld [vmem:[%s1 + $0x60] sm:$0xff]
    %v37 = vld [vmem:[%s1 + $0x68] sm:$0xff]
    %v38 = vld [vmem:[%s1 + $0x70] sm:$0xff]
    %v39 = vld [vmem:[%s1 + $0x78] sm:$0xff]
    %v40 = vld [vmem:[%s2] sm:$0xf]
    %v42 = vlaneseq
    %v43 = vshrl.u32 %v42, 7
    %v44 = vsub.s32 0, %v43
    %v45 = vrot.slane %v40, %v44
    %v46 = vlaneseq
    %v47 = vshrl.u32 %v46, 7
    %v48 = vsub.s32 1, %v47
    %v49 = vrot.slane %v40, %v48
    %v50 = vlaneseq
    %v51 = vshrl.u32 %v50, 7
    %v52 = vsub.s32 2, %v51
    %v53 = vrot.slane %v40, %v52
    %v54 = vlaneseq
    %v55 = vshrl.u32 %v54, 7
    %v56 = vsub.s32 3, %v55
    %v57 = vrot.slane %v40, %v56
    %v78 = vunpack.c.l.b16 %v24
    %v79 = vunpack.c.h.b16 %v24
    %v80 = vunpack.c.l.b16 %v25
    %v81 = vunpack.c.h.b16 %v25
    %v82 = vunpack.c.l.b16 %v26
    %v83 = vunpack.c.h.b16 %v26
    %v84 = vunpack.c.l.b16 %v27
    %v85 = vunpack.c.h.b16 %v27
    %v86 = vunpack.c.l.b16 %v28
    %v87 = vunpack.c.h.b16 %v28
    %v88 = vunpack.c.l.b16 %v29
    %v89 = vunpack.c.h.b16 %v29
    %v90 = vunpack.c.l.b16 %v30
    %v91 = vunpack.c.h.b16 %v30
    %v92 = vunpack.c.l.b16 %v31
    %v93 = vunpack.c.h.b16 %v31
    %v94 = vunpack.c.l.b16 %v32
    %v95 = vunpack.c.h.b16 %v32
    %v96 = vunpack.c.l.b16 %v33
    %v97 = vunpack.c.h.b16 %v33
    %v98 = vunpack.c.l.b16 %v34
    %v99 = vunpack.c.h.b16 %v34
    %v100 = vunpack.c.l.b16 %v35
    %v101 = vunpack.c.h.b16 %v35
    %v102 = vunpack.c.l.b16 %v36
    %v103 = vunpack.c.h.b16 %v36
    %v104 = vunpack.c.l.b16 %v37
    %v105 = vunpack.c.h.b16 %v37
    %v106 = vunpack.c.l.b16 %v38
    %v107 = vunpack.c.h.b16 %v38
    %v108 = vunpack.c.l.b16 %v39
    %v109 = vunpack.c.h.b16 %v39
    %v110 = vpack.c.b16 %v82, %v78
    %v111 = vpack.c.b16 %v83, %v79
    %v112 = vpack.c.b16 %v84, %v80
    %v113 = vpack.c.b16 %v85, %v81
    %v114 = vpack.c.b16 %v90, %v86
    %v115 = vpack.c.b16 %v91, %v87
    %v116 = vpack.c.b16 %v92, %v88
    %v117 = vpack.c.b16 %v93, %v89
    %v118 = vpack.c.b16 %v98, %v94
    %v119 = vpack.c.b16 %v99, %v95
    %v120 = vpack.c.b16 %v100, %v96
    %v121 = vpack.c.b16 %v101, %v97
    %v122 = vpack.c.b16 %v106, %v102
    %v123 = vpack.c.b16 %v107, %v103
    %v124 = vpack.c.b16 %v108, %v104
    %v125 = vpack.c.b16 %v109, %v105
    %vm142 = vcmask 523264
    %v144 = vsel %vm142, %v23, 0
    %146 = vmatprep.subr.bf16.mxu0 0
    %147 = vmatpush1.bf16.msra.mxu0 0
    %148 = vmatprep.subr.bf16.mxu0 0
    %149 = vmatpush1.bf16.msra.mxu0 0
    %150 = vmatprep.subr.bf16.mxu0 0
    %151 = vmatpush1.bf16.msra.mxu0 0
    %152 = vmatprep.subr.bf16.mxu0 0
    %153 = vmatpush1.bf16.msra.mxu0 0
    %154 = vmatprep.subr.bf16.mxu0 %v123
    %155 = vmatpush1.bf16.msra.mxu0 %v122
    %156 = vmatprep.subr.bf16.mxu0 %v119
    %157 = vmatpush1.bf16.msra.mxu0 %v118
    %158 = vmatprep.subr.bf16.mxu0 %v115
    %159 = vmatpush1.bf16.msra.mxu0 %v114
    %160 = vmatprep.subr.bf16.mxu0 %v111
    %161 = vmatpush1.bf16.msra.mxu0 %v110
    %162 = vmatprep.subr.bf16.mxu0 0
    %163 = vmatpush2.bf16.msra.mxu0 0
    %164 = vmatprep.subr.bf16.mxu0 0
    %165 = vmatpush2.bf16.msra.mxu0 0
    %166 = vmatprep.subr.bf16.mxu0 0
    %167 = vmatpush2.bf16.msra.mxu0 0
    %168 = vmatprep.subr.bf16.mxu0 0
    %169 = vmatpush2.bf16.msra.mxu0 0
    %170 = vmatprep.subr.bf16.mxu0 0
    %171 = vmatpush2.bf16.msra.mxu0 0
    %172 = vmatprep.subr.bf16.mxu0 0
    %173 = vmatpush2.bf16.msra.mxu0 0
    %174 = vmatprep.subr.bf16.mxu0 0
    %175 = vmatpush2.bf16.msra.mxu0 0
    %176 = vmatprep.subr.bf16.mxu0 0
    %177 = vmatpush2.bf16.msra.mxu0 0
    %178 = vmatprep.mubr.bf16.mxu0 0
    %179 = vmatmul.mubr.bf16.gmra.mxu0 %v144
    %v180 = vpop.f32.mrf.mxu0
    %v181 = vadd.f32 %v45, %v180
    %v182 = vpop.f32.mrf.mxu0
    %v183 = vadd.f32 %v49, %v182
    %v184 = vpop.f32.mrf.mxu0
    %v185 = vpop.f32.mrf.mxu0
    %186 = vdwg.mxu0
    %187 = vmatprep.subr.bf16.mxu0 0
    %188 = vmatpush1.bf16.msra.mxu0 0
    %189 = vmatprep.subr.bf16.mxu0 0
    %190 = vmatpush1.bf16.msra.mxu0 0
    %191 = vmatprep.subr.bf16.mxu0 0
    %192 = vmatpush1.bf16.msra.mxu0 0
    %193 = vmatprep.subr.bf16.mxu0 0
    %194 = vmatpush1.bf16.msra.mxu0 0
    %195 = vmatprep.subr.bf16.mxu0 %v125
    %196 = vmatpush1.bf16.msra.mxu0 %v124
    %197 = vmatprep.subr.bf16.mxu0 %v121
    %198 = vmatpush1.bf16.msra.mxu0 %v120
    %199 = vmatprep.subr.bf16.mxu0 %v117
    %200 = vmatpush1.bf16.msra.mxu0 %v116
    %201 = vmatprep.subr.bf16.mxu0 %v113
    %202 = vmatpush1.bf16.msra.mxu0 %v112
    %203 = vmatprep.subr.bf16.mxu0 0
    %204 = vmatpush2.bf16.msra.mxu0 0
    %205 = vmatprep.subr.bf16.mxu0 0
    %206 = vmatpush2.bf16.msra.mxu0 0
    %207 = vmatprep.subr.bf16.mxu0 0
    %208 = vmatpush2.bf16.msra.mxu0 0
    %209 = vmatprep.subr.bf16.mxu0 0
    %210 = vmatpush2.bf16.msra.mxu0 0
    %211 = vmatprep.subr.bf16.mxu0 0
    %212 = vmatpush2.bf16.msra.mxu0 0
    %213 = vmatprep.subr.bf16.mxu0 0
    %214 = vmatpush2.bf16.msra.mxu0 0
    %215 = vmatprep.subr.bf16.mxu0 0
    %216 = vmatpush2.bf16.msra.mxu0 0
    %217 = vmatprep.subr.bf16.mxu0 0
    %218 = vmatpush2.bf16.msra.mxu0 0
    %219 = vmatprep.mubr.bf16.mxu0 0
    %220 = vmatmul.mubr.bf16.gmra.mxu0 %v144
    %v221 = vpop.f32.mrf.mxu0
    %v222 = vadd.f32 %v53, %v221
    %v223 = vpop.f32.mrf.mxu0
    %v224 = vadd.f32 %v57, %v223
    %v225 = vpop.f32.mrf.mxu0
    %v226 = vpop.f32.mrf.mxu0
    %227 = vdwg.mxu0
    %v228 = vmin.f32 %v181, 20.0
    %v229 = vmin.f32 %v183, 20.0
    %v230 = vmin.f32 %v222, 20.0
    %v231 = vmin.f32 %v224, 20.0
    %v232 = vmul.f32 %v228, 1.442695
    %v233 = vpow.pop %v232
    %v234 = vmul.f32 %v229, 1.442695
    %v235 = vpow.pop %v234
    %v236 = vmul.f32 %v230, 1.442695
    %v237 = vpow.pop %v236
    %v238 = vmul.f32 %v231, 1.442695
    %v239 = vpow.pop %v238
    %v240 = vadd.f32 %v233, 2.0
    %v241 = vadd.f32 %v235, 2.0
    %v242 = vadd.f32 %v237, 2.0
    %v243 = vadd.f32 %v239, 2.0
    %v244 = vmul.f32 %v233, %v240
    %v245 = vmul.f32 %v235, %v241
    %v246 = vmul.f32 %v237, %v242
    %v247 = vmul.f32 %v239, %v243
    %v248 = vmul.f32 %v181, %v244
    %v249 = vmul.f32 %v183, %v245
    %v250 = vmul.f32 %v222, %v246
    %v251 = vmul.f32 %v224, %v247
    %v252 = vadd.f32 %v244, 2.0
    %v253 = vadd.f32 %v245, 2.0
    %v254 = vadd.f32 %v246, 2.0
    %v255 = vadd.f32 %v247, 2.0
    %v256 = vrcp.pop %v252
    %v257 = vrcp.pop %v253
    %v258 = vrcp.pop %v254
    %v259 = vrcp.pop %v255
    %v260 = vmul.f32 %v248, %v256
    %v261 = vmul.f32 %v249, %v257
    %v262 = vmul.f32 %v250, %v258
    %v263 = vmul.f32 %v251, %v259
    %v264 = vpack.c.bf16 %v260, %v260
    %v265 = vpack.c.bf16 %v261, %v261
    %v266 = vpack.c.bf16 %v262, %v262
    %v267 = vpack.c.bf16 %v263, %v263
    %v268 = vld [vmem:[%s3] sm:$0xf]
    %v269 = vld [vmem:[%s3 + $0x4] sm:$0xf]
    %v270 = vld [vmem:[%s3 + $0x8] sm:$0xf]
    %v271 = vld [vmem:[%s3 + $0xc] sm:$0xf]
    %v272 = vld [vmem:[%s3 + $0x10] sm:$0xf]
    %v273 = vld [vmem:[%s3 + $0x14] sm:$0xf]
    %v274 = vld [vmem:[%s3 + $0x18] sm:$0xf]
    %v275 = vld [vmem:[%s3 + $0x1c] sm:$0xf]
    %v276 = vld [vmem:[%s3 + $0x20] sm:$0xf]
    %v277 = vld [vmem:[%s3 + $0x24] sm:$0xf]
    %v278 = vld [vmem:[%s3 + $0x28] sm:$0xf]
    %v279 = vld [vmem:[%s3 + $0x2c] sm:$0xf]
    %v280 = vld [vmem:[%s3 + $0x30] sm:$0xf]
    %v281 = vld [vmem:[%s3 + $0x34] sm:$0xf]
    %v282 = vld [vmem:[%s3 + $0x38] sm:$0xf]
    %v283 = vld [vmem:[%s3 + $0x3c] sm:$0xf]
    %v284 = vld [vmem:[%s3 + $0x40] sm:$0xf]
    %v285 = vld [vmem:[%s3 + $0x44] sm:$0xf]
    %v286 = vld [vmem:[%s3 + $0x48] sm:$0xf]
    %v287 = vld [vmem:[%s3 + $0x4c] sm:$0xf]
    %v288 = vld [vmem:[%s3 + $0x50] sm:$0xf]
    %v289 = vld [vmem:[%s3 + $0x54] sm:$0xf]
    %v290 = vld [vmem:[%s3 + $0x58] sm:$0xf]
    %v291 = vld [vmem:[%s3 + $0x5c] sm:$0xf]
    %v292 = vld [vmem:[%s3 + $0x60] sm:$0xf]
    %v293 = vld [vmem:[%s3 + $0x64] sm:$0xf]
    %v294 = vld [vmem:[%s3 + $0x68] sm:$0xf]
    %v295 = vld [vmem:[%s3 + $0x6c] sm:$0xf]
    %v296 = vld [vmem:[%s3 + $0x70] sm:$0xf]
    %v297 = vld [vmem:[%s3 + $0x74] sm:$0xf]
    %v298 = vld [vmem:[%s3 + $0x78] sm:$0xf]
    %v299 = vld [vmem:[%s3 + $0x7c] sm:$0xf]
    %v300 = vld [vmem:[%s3 + $0x80] sm:$0xf]
    %v301 = vld [vmem:[%s3 + $0x84] sm:$0xf]
    %v302 = vld [vmem:[%s3 + $0x88] sm:$0xf]
    %v303 = vld [vmem:[%s3 + $0x8c] sm:$0xf]
    %v304 = vld [vmem:[%s3 + $0x90] sm:$0xf]
    %v305 = vld [vmem:[%s3 + $0x94] sm:$0xf]
    %v306 = vld [vmem:[%s3 + $0x98] sm:$0xf]
    %v307 = vld [vmem:[%s3 + $0x9c] sm:$0xf]
    %v308 = vld [vmem:[%s3 + $0xa0] sm:$0xf]
    %v309 = vld [vmem:[%s3 + $0xa4] sm:$0xf]
    %v310 = vld [vmem:[%s3 + $0xa8] sm:$0xf]
    %v311 = vld [vmem:[%s3 + $0xac] sm:$0xf]
    %v312 = vld [vmem:[%s3 + $0xb0] sm:$0xf]
    %v313 = vld [vmem:[%s3 + $0xb4] sm:$0xf]
    %v314 = vld [vmem:[%s3 + $0xb8] sm:$0xf]
    %v315 = vld [vmem:[%s3 + $0xbc] sm:$0xf]
    %v316 = vld [vmem:[%s3 + $0xc0] sm:$0xf]
    %v317 = vld [vmem:[%s3 + $0xc4] sm:$0xf]
    %v318 = vld [vmem:[%s3 + $0xc8] sm:$0xf]
    %v319 = vld [vmem:[%s3 + $0xcc] sm:$0xf]
    %v320 = vld [vmem:[%s3 + $0xd0] sm:$0xf]
    %v321 = vld [vmem:[%s3 + $0xd4] sm:$0xf]
    %v322 = vld [vmem:[%s3 + $0xd8] sm:$0xf]
    %v323 = vld [vmem:[%s3 + $0xdc] sm:$0xf]
    %v324 = vld [vmem:[%s3 + $0xe0] sm:$0xf]
    %v325 = vld [vmem:[%s3 + $0xe4] sm:$0xf]
    %v326 = vld [vmem:[%s3 + $0xe8] sm:$0xf]
    %v327 = vld [vmem:[%s3 + $0xec] sm:$0xf]
    %v328 = vld [vmem:[%s3 + $0xf0] sm:$0xf]
    %v329 = vld [vmem:[%s3 + $0xf4] sm:$0xf]
    %v330 = vld [vmem:[%s3 + $0xf8] sm:$0xf]
    %v331 = vld [vmem:[%s3 + $0xfc] sm:$0xf]
    %v332 = vld [vmem:[%s4] sm:$0x1]
    %v334 = vlaneseq
    %v335 = vshrl.u32 %v334, 7
    %v336 = vsub.s32 0, %v335
    %v337 = vrot.slane %v332, %v336
    %v403 = vunpack.c.l.b16 %v268
    %v404 = vunpack.c.l.b16 %v269
    %v405 = vunpack.c.l.b16 %v270
    %v406 = vunpack.c.l.b16 %v271
    %v407 = vunpack.c.l.b16 %v272
    %v408 = vunpack.c.l.b16 %v273
    %v409 = vunpack.c.l.b16 %v274
    %v410 = vunpack.c.l.b16 %v275
    %v411 = vunpack.c.l.b16 %v276
    %v412 = vunpack.c.l.b16 %v277
    %v413 = vunpack.c.l.b16 %v278
    %v414 = vunpack.c.l.b16 %v279
    %v415 = vunpack.c.l.b16 %v280
    %v416 = vunpack.c.l.b16 %v281
    %v417 = vunpack.c.l.b16 %v282
    %v418 = vunpack.c.l.b16 %v283
    %v419 = vunpack.c.l.b16 %v284
    %v420 = vunpack.c.l.b16 %v285
    %v421 = vunpack.c.l.b16 %v286
    %v422 = vunpack.c.l.b16 %v287
    %v423 = vunpack.c.l.b16 %v288
    %v424 = vunpack.c.l.b16 %v289
    %v425 = vunpack.c.l.b16 %v290
    %v426 = vunpack.c.l.b16 %v291
    %v427 = vunpack.c.l.b16 %v292
    %v428 = vunpack.c.l.b16 %v293
    %v429 = vunpack.c.l.b16 %v294
    %v430 = vunpack.c.l.b16 %v295
    %v431 = vunpack.c.l.b16 %v296
    %v432 = vunpack.c.l.b16 %v297
    %v433 = vunpack.c.l.b16 %v298
    %v434 = vunpack.c.l.b16 %v299
    %v435 = vunpack.c.l.b16 %v300
    %v436 = vunpack.c.l.b16 %v301
    %v437 = vunpack.c.l.b16 %v302
    %v438 = vunpack.c.l.b16 %v303
    %v439 = vunpack.c.l.b16 %v304
    %v440 = vunpack.c.l.b16 %v305
    %v441 = vunpack.c.l.b16 %v306
    %v442 = vunpack.c.l.b16 %v307
    %v443 = vunpack.c.l.b16 %v308
    %v444 = vunpack.c.l.b16 %v309
    %v445 = vunpack.c.l.b16 %v310
    %v446 = vunpack.c.l.b16 %v311
    %v447 = vunpack.c.l.b16 %v312
    %v448 = vunpack.c.l.b16 %v313
    %v449 = vunpack.c.l.b16 %v314
    %v450 = vunpack.c.l.b16 %v315
    %v451 = vunpack.c.l.b16 %v316
    %v452 = vunpack.c.l.b16 %v317
    %v453 = vunpack.c.l.b16 %v318
    %v454 = vunpack.c.l.b16 %v319
    %v455 = vunpack.c.l.b16 %v320
    %v456 = vunpack.c.l.b16 %v321
    %v457 = vunpack.c.l.b16 %v322
    %v458 = vunpack.c.l.b16 %v323
    %v459 = vunpack.c.l.b16 %v324
    %v460 = vunpack.c.l.b16 %v325
    %v461 = vunpack.c.l.b16 %v326
    %v462 = vunpack.c.l.b16 %v327
    %v463 = vunpack.c.l.b16 %v328
    %v464 = vunpack.c.l.b16 %v329
    %v465 = vunpack.c.l.b16 %v330
    %v466 = vunpack.c.l.b16 %v331
    %v467 = vpack.c.b16 %v404, %v403
    %v468 = vpack.c.b16 %v406, %v405
    %v469 = vpack.c.b16 %v408, %v407
    %v470 = vpack.c.b16 %v410, %v409
    %v471 = vpack.c.b16 %v412, %v411
    %v472 = vpack.c.b16 %v414, %v413
    %v473 = vpack.c.b16 %v416, %v415
    %v474 = vpack.c.b16 %v418, %v417
    %v475 = vpack.c.b16 %v420, %v419
    %v476 = vpack.c.b16 %v422, %v421
    %v477 = vpack.c.b16 %v424, %v423
    %v478 = vpack.c.b16 %v426, %v425
    %v479 = vpack.c.b16 %v428, %v427
    %v480 = vpack.c.b16 %v430, %v429
    %v481 = vpack.c.b16 %v432, %v431
    %v482 = vpack.c.b16 %v434, %v433
    %v483 = vpack.c.b16 %v436, %v435
    %v484 = vpack.c.b16 %v438, %v437
    %v485 = vpack.c.b16 %v440, %v439
    %v486 = vpack.c.b16 %v442, %v441
    %v487 = vpack.c.b16 %v444, %v443
    %v488 = vpack.c.b16 %v446, %v445
    %v489 = vpack.c.b16 %v448, %v447
    %v490 = vpack.c.b16 %v450, %v449
    %v491 = vpack.c.b16 %v452, %v451
    %v492 = vpack.c.b16 %v454, %v453
    %v493 = vpack.c.b16 %v456, %v455
    %v494 = vpack.c.b16 %v458, %v457
    %v495 = vpack.c.b16 %v460, %v459
    %v496 = vpack.c.b16 %v462, %v461
    %v497 = vpack.c.b16 %v464, %v463
    %v498 = vpack.c.b16 %v466, %v465
    %531 = vmatprep.subr.bf16.mxu0 0
    %532 = vmatpush1.bf16.msra.mxu0 %v474
    %533 = vmatprep.subr.bf16.mxu0 0
    %534 = vmatpush1.bf16.msra.mxu0 %v473
    %535 = vmatprep.subr.bf16.mxu0 0
    %536 = vmatpush1.bf16.msra.mxu0 %v472
    %537 = vmatprep.subr.bf16.mxu0 0
    %538 = vmatpush1.bf16.msra.mxu0 %v471
    %539 = vmatprep.subr.bf16.mxu0 0
    %540 = vmatpush1.bf16.msra.mxu0 %v470
    %541 = vmatprep.subr.bf16.mxu0 0
    %542 = vmatpush1.bf16.msra.mxu0 %v469
    %543 = vmatprep.subr.bf16.mxu0 0
    %544 = vmatpush1.bf16.msra.mxu0 %v468
    %545 = vmatprep.subr.bf16.mxu0 0
    %546 = vmatpush1.bf16.msra.mxu0 %v467
    %547 = vmatprep.subr.bf16.mxu0 0
    %548 = vmatpush2.bf16.msra.mxu0 %v482
    %549 = vmatprep.subr.bf16.mxu0 0
    %550 = vmatpush2.bf16.msra.mxu0 %v481
    %551 = vmatprep.subr.bf16.mxu0 0
    %552 = vmatpush2.bf16.msra.mxu0 %v480
    %553 = vmatprep.subr.bf16.mxu0 0
    %554 = vmatpush2.bf16.msra.mxu0 %v479
    %555 = vmatprep.subr.bf16.mxu0 0
    %556 = vmatpush2.bf16.msra.mxu0 %v478
    %557 = vmatprep.subr.bf16.mxu0 0
    %558 = vmatpush2.bf16.msra.mxu0 %v477
    %559 = vmatprep.subr.bf16.mxu0 0
    %560 = vmatpush2.bf16.msra.mxu0 %v476
    %561 = vmatprep.subr.bf16.mxu0 0
    %562 = vmatpush2.bf16.msra.mxu0 %v475
    %563 = vmatprep.mubr.bf16.mxu0 %v265
    %564 = vmatmul.mubr.bf16.gmra.mxu0 %v264
    %v565 = vpop.f32.mrf.mxu0
    %v566 = vadd.f32 %v337, %v565
    %v567 = vpop.f32.mrf.mxu0
    %v568 = vpop.f32.mrf.mxu0
    %v569 = vpop.f32.mrf.mxu0
    %570 = vdwg.mxu0
    %571 = vmatprep.subr.bf16.mxu0 0
    %572 = vmatpush1.bf16.msra.mxu0 %v490
    %573 = vmatprep.subr.bf16.mxu0 0
    %574 = vmatpush1.bf16.msra.mxu0 %v489
    %575 = vmatprep.subr.bf16.mxu0 0
    %576 = vmatpush1.bf16.msra.mxu0 %v488
    %577 = vmatprep.subr.bf16.mxu0 0
    %578 = vmatpush1.bf16.msra.mxu0 %v487
    %579 = vmatprep.subr.bf16.mxu0 0
    %580 = vmatpush1.bf16.msra.mxu0 %v486
    %581 = vmatprep.subr.bf16.mxu0 0
    %582 = vmatpush1.bf16.msra.mxu0 %v485
    %583 = vmatprep.subr.bf16.mxu0 0
    %584 = vmatpush1.bf16.msra.mxu0 %v484
    %585 = vmatprep.subr.bf16.mxu0 0
    %586 = vmatpush1.bf16.msra.mxu0 %v483
    %587 = vmatprep.subr.bf16.mxu0 0
    %588 = vmatpush2.bf16.msra.mxu0 %v498
    %589 = vmatprep.subr.bf16.mxu0 0
    %590 = vmatpush2.bf16.msra.mxu0 %v497
    %591 = vmatprep.subr.bf16.mxu0 0
    %592 = vmatpush2.bf16.msra.mxu0 %v496
    %593 = vmatprep.subr.bf16.mxu0 0
    %594 = vmatpush2.bf16.msra.mxu0 %v495
    %595 = vmatprep.subr.bf16.mxu0 0
    %596 = vmatpush2.bf16.msra.mxu0 %v494
    %597 = vmatprep.subr.bf16.mxu0 0
    %598 = vmatpush2.bf16.msra.mxu0 %v493
    %599 = vmatprep.subr.bf16.mxu0 0
    %600 = vmatpush2.bf16.msra.mxu0 %v492
    %601 = vmatprep.subr.bf16.mxu0 0
    %602 = vmatpush2.bf16.msra.mxu0 %v491
    %603 = vmatprep.mubr.bf16.mxu0 %v267
    %604 = vmatmul.mubr.bf16.gmra.mxu0 %v266
    %v605 = vpop.f32.mrf.mxu0
    %v606 = vadd.f32 %v566, %v605
    %v607 = vpop.f32.mrf.mxu0
    %v608 = vpop.f32.mrf.mxu0
    %v609 = vpop.f32.mrf.mxu0
    %610 = vdwg.mxu0
    %vm611 = vcmask 41984
    %v612 = vsel %vm611, %v606, 0.0
    %613 = vadd.xlane.f32.xlu0 %v612
    %v614 = vpop.xlane.xlu0 %613
    %v615 = vrcp.pop 6.0
    %v616 = vmul.f32 %v614, %v615
    %v617 = vsub.f32 %v606, %v616
    %619 = vset.pattern.permute.xlu0 6
    %620 = vperm.xlu0 %619, %v606
    %v621 = vpop.permute.xlu0 %620
    %v623 = vadd.f32 %v621, %v617
    %624 = vst.msk [vmem:[#allocation2] sm:$0x3] %vm611, %v623
    // Predicated region
    $region22: #{rainbow_forward.9} parent=1 // pred_check
      _
    $region23: #{rainbow_forward.9} parent=1 // pred_check_branch
      %626 = sbr.rel (0) target = $region25
    $region24: #{rainbow_forward.9} parent=1 // pred_region
      %s628 = ssub.s32 32, 32
      %629 = vsyncadd [#allocation3], %s628
      %s631 = sshll.u32 [#allocation2], 4
      %s632 = int_to_ptr.vmem [resolvable:$true] %s631
      %634 = dma.vmem_to_hbm [thread:$0]  %s632, 32, %s5, [#allocation3]
    $region25: #{rainbow_forward.9} parent=1 // pred_fallthru
      _
    // Predicated region
    $region26: #{rainbow_forward.9} parent=1 // pred_check
      _
    $region27: #{rainbow_forward.9} parent=1 // pred_check_branch
      %636 = sbr.rel (0) target = $region29
    $region28: #{rainbow_forward.9} parent=1 // pred_region
      %637 = dma.done [#allocation3], 32
    $region29: #{rainbow_forward.9} parent=1 // pred_fallthru
      _
    %638 = vsyncpa [#allocation3], 1

</llo_original>
